<compile_context>
chip_gen: v7x
topology: tpu7x:2x2x1
jax: 0.10.0
libtpu: 0.0.40
codegen_flags: <defaults>
</compile_context>

<pallas_src>
import jax
import jax.numpy as jnp
from jax.experimental import pallas as pl
from jax.experimental.pallas import tpu as pltpu


TB = 8  # batch tile (sublane multiple); one grid step per tile


def _round_up(x, m):
    return ((x + m - 1) // m) * m


def dan_kernel(ids_ref, emb_ref, w_ref, b_ref, out_ref, pooled_ref):
    # ids_ref   : SMEM (Bp, S)  int32  (scalar-prefetched token ids, full array)
    # emb_ref   : VMEM (V, Dp)  f32    (embedding table, emb_dim zero-padded to Dp)
    # w_ref     : VMEM (Dp, Op) f32    (linear weight, pre-transposed + zero-padded)
    # b_ref     : VMEM (1, Op)  f32
    # out_ref   : VMEM (TB, Op) f32    (this grid step's batch tile, lane-dense)
    # pooled_ref: VMEM (TB, Dp) f32    scratch for the mean-pooled embeddings
    g = pl.program_id(0)
    TBk, Dp = pooled_ref.shape
    S = ids_ref.shape[1]
    V = emb_ref.shape[0]
    inv_s = jnp.float32(1.0 / S)

    # Independent partial accumulators break the serial VPU add chain.
    npart = 4 if S >= 4 else max(1, S)

    # B*S is tiny here; for large B*S switch to lax.fori_loop(..., unroll=True).
    for b in range(TBk):
        row = g * TBk + b
        parts = [jnp.zeros((1, Dp), jnp.float32) for _ in range(npart)]
        for s in range(S):
            tok = ids_ref[row, s]
            tok = jnp.minimum(jnp.maximum(tok, 0), V - 1)   # clamp (torch would raise)
            parts[s % npart] = parts[s % npart] + emb_ref[pl.ds(tok, 1), :]
        # Tree-add the partials.
        while len(parts) > 1:
            nxt = [parts[i] + parts[i + 1] for i in range(0, len(parts) - 1, 2)]
            if len(parts) % 2:
                nxt.append(parts[-1])
            parts = nxt
        pooled_ref[pl.ds(b, 1), :] = parts[0] * inv_s       # fold the mean in here

    h = jnp.tanh(pooled_ref[...])                           # (TB, Dp), EUP
    # Weight already (Dp, Op): contraction feeds the MXU directly, no transpose.
    out_ref[...] = jnp.dot(h, w_ref[...],
                           preferred_element_type=jnp.float32) + b_ref[...]


def prepare_params(emb_table, w, b):
    """One-time (init-time) padding / transposition of the parameters.

    Hoisted out of the forward path so no per-call HBM copy/transposition of the
    table or weight happens.
    """
    V, D = emb_table.shape
    O = w.shape[0]
    Dp = _round_up(D, 128)   # lane-align emb dim: full-lane gathers / tanh / MXU feed
    Op = _round_up(O, 128)   # lane-dense output width: unmasked full-lane stores

    emb_pad = jnp.zeros((V, Dp), jnp.float32).at[:, :D].set(emb_table.astype(jnp.float32))
    w_t_pad = jnp.zeros((Dp, Op), jnp.float32).at[:D, :O].set(w.astype(jnp.float32).T)
    b_pad = jnp.zeros((1, Op), jnp.float32).at[0, :O].set(b.astype(jnp.float32))
    return emb_pad, w_t_pad, b_pad, O


def basic_dan_forward(ids, emb_pad, w_t_pad, b_pad, out_size):
    """ids: (B,S) int; pre-padded params from prepare_params -> (B, out_size) f32."""
    B, S = ids.shape
    V, Dp = emb_pad.shape
    Op = w_t_pad.shape[1]

    Bp = _round_up(max(B, TB), TB)
    ids_pad = jnp.zeros((Bp, S), jnp.int32).at[:B, :].set(ids.astype(jnp.int32))

    out_pad = pl.pallas_call(
        dan_kernel,
        out_shape=jax.ShapeDtypeStruct((Bp, Op), jnp.float32),
        grid_spec=pltpu.PrefetchScalarGridSpec(
            num_scalar_prefetch=1,               # ids -> SMEM, passed to index_maps
            grid=(Bp // TB,),                    # batch tiles; "parallel" -> v7x 2nd TC
            in_specs=[
                pl.BlockSpec((V, Dp), lambda i, ids_sref: (0, 0)),    # emb table
                pl.BlockSpec((Dp, Op), lambda i, ids_sref: (0, 0)),   # w^T (Dp, Op)
                pl.BlockSpec((1, Op), lambda i, ids_sref: (0, 0)),    # bias (1, Op)
            ],
            out_specs=pl.BlockSpec((TB, Op), lambda i, ids_sref: (i, 0)),
            scratch_shapes=[pltpu.VMEM((TB, Dp), jnp.float32)],       # pooled scratch
        ),
        compiler_params=pltpu.CompilerParams(
            dimension_semantics=("parallel",),
            # At real table sizes: raise vmem_limit_bytes (v5e/v6e) or move the
            # table to HBM + DMA gather / bf16 storage (esp. v7x, 64 MiB VMEM).
        ),
    )(ids_pad, emb_pad, w_t_pad, b_pad)

    return out_pad[:B, :out_size]


def reference_forward(ids, emb_table, w, b):
    gathered = jnp.take(emb_table, ids, axis=0)          # (B, S, D)
    h = jnp.tanh(jnp.mean(gathered, axis=1))             # (B, D)
    return h @ w.T + b[None, :]                          # (B, O)


if __name__ == "__main__":
    # Small shapes consistent with the module.
    vocab_size, emb_dim, out_size = 16, 32, 1
    batch, seq = 2, 8

    key = jax.random.PRNGKey(0)
    k_emb, k_w, k_b, k_ids = jax.random.split(key, 4)

    # nn.Embedding default init: N(0, 1)
    emb_table = jax.random.normal(k_emb, (vocab_size, emb_dim), dtype=jnp.float32)
    # nn.init.xavier_uniform_ for out.weight
    limit = (6.0 / (emb_dim + out_size)) ** 0.5
    w = jax.random.uniform(k_w, (out_size, emb_dim), dtype=jnp.float32,
                           minval=-limit, maxval=limit)
    # nn.Linear default bias init: U(-1/sqrt(fan_in), 1/sqrt(fan_in))
    b_lim = 1.0 / (emb_dim ** 0.5)
    b = jax.random.uniform(k_b, (out_size,), dtype=jnp.float32,
                           minval=-b_lim, maxval=b_lim)

    ids = jax.random.randint(k_ids, (batch, seq), 0, vocab_size, dtype=jnp.int32)

    # One-time parameter preparation (hoisted out of the forward path).
    emb_pad, w_t_pad, b_pad, o_size = prepare_params(emb_table, w, b)

    out = basic_dan_forward(ids, emb_pad, w_t_pad, b_pad, o_size)
    out = jax.block_until_ready(out)

    ref = reference_forward(ids, emb_table, w, b)
    assert out.shape == (batch, out_size)
    assert jnp.allclose(out, ref, atol=1e-5, rtol=1e-5), (out, ref)

    print("KERNEL_OK")
</pallas_src>

<mosaic_0001>
module attributes {stable_mosaic.version = 11 : i64} {
  func.func @dan_kernel(%arg0: i32, %arg1: memref<8x8xi32, #tpu.memory_space<smem>>, %arg2: memref<16x128xf32, #tpu.memory_space<vmem>>, %arg3: memref<128x128xf32, #tpu.memory_space<vmem>>, %arg4: memref<1x128xf32, #tpu.memory_space<vmem>>, %arg5: memref<8x128xf32, #tpu.memory_space<vmem>>, %arg6: memref<8x128xf32, #tpu.memory_space<vmem>>) attributes {dimension_semantics = [#tpu.dimension_semantics<parallel>], iteration_bounds = array<i64: 1>, scalar_prefetch = 1 : i64, scratch_operands = 1 : i64, tpu.core_type = #tpu.core_type<tc>, window_params = [{pipeline_mode = #tpu.pipeline_mode<synchronous>, transform_indices = @transform_0, window_bounds = array<i64: 16, 128>}, {pipeline_mode = #tpu.pipeline_mode<synchronous>, transform_indices = @transform_1, window_bounds = array<i64: 128, 128>}, {pipeline_mode = #tpu.pipeline_mode<synchronous>, transform_indices = @transform_2, window_bounds = array<i64: 1, 128>}, {transform_indices = @transform_3, window_bounds = array<i64: 8, 128>}]} {
    %c8_i32 = arith.constant 8 : i32
    %0 = arith.muli %arg0, %c8_i32 : i32
    %c0_i32 = arith.constant 0 : i32
    %1 = arith.addi %0, %c0_i32 : i32
    %cst = arith.constant 0.000000e+00 : f32
    %2 = vector.broadcast %cst : f32 to vector<1x128xf32>
    %cst_0 = arith.constant 0.000000e+00 : f32
    %3 = vector.broadcast %cst_0 : f32 to vector<1x128xf32>
    %cst_1 = arith.constant 0.000000e+00 : f32
    %4 = vector.broadcast %cst_1 : f32 to vector<1x128xf32>
    %cst_2 = arith.constant 0.000000e+00 : f32
    %5 = vector.broadcast %cst_2 : f32 to vector<1x128xf32>
    %6 = arith.index_cast %1 : i32 to index
    %c0 = arith.constant 0 : index
    %7 = memref.load %arg1[%6, %c0] : memref<8x8xi32, #tpu.memory_space<smem>>
    %c0_i32_3 = arith.constant 0 : i32
    %8 = arith.maxsi %7, %c0_i32_3 : i32
    %c15_i32 = arith.constant 15 : i32
    %9 = arith.minsi %8, %c15_i32 : i32
    %10 = arith.index_cast %9 : i32 to index
    %c0_4 = arith.constant 0 : index
    %11 = vector.load %arg2[%10, %c0_4] : memref<16x128xf32, #tpu.memory_space<vmem>>, vector<1x128xf32>
    %12 = arith.addf %2, %11 : vector<1x128xf32>
    %13 = arith.index_cast %1 : i32 to index
    %c1 = arith.constant 1 : index
    %14 = memref.load %arg1[%13, %c1] : memref<8x8xi32, #tpu.memory_space<smem>>
    %c0_i32_5 = arith.constant 0 : i32
    %15 = arith.maxsi %14, %c0_i32_5 : i32
    %c15_i32_6 = arith.constant 15 : i32
    %16 = arith.minsi %15, %c15_i32_6 : i32
    %17 = arith.index_cast %16 : i32 to index
    %c0_7 = arith.constant 0 : index
    %18 = vector.load %arg2[%17, %c0_7] : memref<16x128xf32, #tpu.memory_space<vmem>>, vector<1x128xf32>
    %19 = arith.addf %3, %18 : vector<1x128xf32>
    %20 = arith.index_cast %1 : i32 to index
    %c2 = arith.constant 2 : index
    %21 = memref.load %arg1[%20, %c2] : memref<8x8xi32, #tpu.memory_space<smem>>
    %c0_i32_8 = arith.constant 0 : i32
    %22 = arith.maxsi %21, %c0_i32_8 : i32
    %c15_i32_9 = arith.constant 15 : i32
    %23 = arith.minsi %22, %c15_i32_9 : i32
    %24 = arith.index_cast %23 : i32 to index
    %c0_10 = arith.constant 0 : index
    %25 = vector.load %arg2[%24, %c0_10] : memref<16x128xf32, #tpu.memory_space<vmem>>, vector<1x128xf32>
    %26 = arith.addf %4, %25 : vector<1x128xf32>
    %27 = arith.index_cast %1 : i32 to index
    %c3 = arith.constant 3 : index
    %28 = memref.load %arg1[%27, %c3] : memref<8x8xi32, #tpu.memory_space<smem>>
    %c0_i32_11 = arith.constant 0 : i32
    %29 = arith.maxsi %28, %c0_i32_11 : i32
    %c15_i32_12 = arith.constant 15 : i32
    %30 = arith.minsi %29, %c15_i32_12 : i32
    %31 = arith.index_cast %30 : i32 to index
    %c0_13 = arith.constant 0 : index
    %32 = vector.load %arg2[%31, %c0_13] : memref<16x128xf32, #tpu.memory_space<vmem>>, vector<1x128xf32>
    %33 = arith.addf %5, %32 : vector<1x128xf32>
    %34 = arith.index_cast %1 : i32 to index
    %c4 = arith.constant 4 : index
    %35 = memref.load %arg1[%34, %c4] : memref<8x8xi32, #tpu.memory_space<smem>>
    %c0_i32_14 = arith.constant 0 : i32
    %36 = arith.maxsi %35, %c0_i32_14 : i32
    %c15_i32_15 = arith.constant 15 : i32
    %37 = arith.minsi %36, %c15_i32_15 : i32
    %38 = arith.index_cast %37 : i32 to index
    %c0_16 = arith.constant 0 : index
    %39 = vector.load %arg2[%38, %c0_16] : memref<16x128xf32, #tpu.memory_space<vmem>>, vector<1x128xf32>
    %40 = arith.addf %12, %39 : vector<1x128xf32>
    %41 = arith.index_cast %1 : i32 to index
    %c5 = arith.constant 5 : index
    %42 = memref.load %arg1[%41, %c5] : memref<8x8xi32, #tpu.memory_space<smem>>
    %c0_i32_17 = arith.constant 0 : i32
    %43 = arith.maxsi %42, %c0_i32_17 : i32
    %c15_i32_18 = arith.constant 15 : i32
    %44 = arith.minsi %43, %c15_i32_18 : i32
    %45 = arith.index_cast %44 : i32 to index
    %c0_19 = arith.constant 0 : index
    %46 = vector.load %arg2[%45, %c0_19] : memref<16x128xf32, #tpu.memory_space<vmem>>, vector<1x128xf32>
    %47 = arith.addf %19, %46 : vector<1x128xf32>
    %48 = arith.index_cast %1 : i32 to index
    %c6 = arith.constant 6 : index
    %49 = memref.load %arg1[%48, %c6] : memref<8x8xi32, #tpu.memory_space<smem>>
    %c0_i32_20 = arith.constant 0 : i32
    %50 = arith.maxsi %49, %c0_i32_20 : i32
    %c15_i32_21 = arith.constant 15 : i32
    %51 = arith.minsi %50, %c15_i32_21 : i32
    %52 = arith.index_cast %51 : i32 to index
    %c0_22 = arith.constant 0 : index
    %53 = vector.load %arg2[%52, %c0_22] : memref<16x128xf32, #tpu.memory_space<vmem>>, vector<1x128xf32>
    %54 = arith.addf %26, %53 : vector<1x128xf32>
    %55 = arith.index_cast %1 : i32 to index
    %c7 = arith.constant 7 : index
    %56 = memref.load %arg1[%55, %c7] : memref<8x8xi32, #tpu.memory_space<smem>>
    %c0_i32_23 = arith.constant 0 : i32
    %57 = arith.maxsi %56, %c0_i32_23 : i32
    %c15_i32_24 = arith.constant 15 : i32
    %58 = arith.minsi %57, %c15_i32_24 : i32
    %59 = arith.index_cast %58 : i32 to index
    %c0_25 = arith.constant 0 : index
    %60 = vector.load %arg2[%59, %c0_25] : memref<16x128xf32, #tpu.memory_space<vmem>>, vector<1x128xf32>
    %61 = arith.addf %33, %60 : vector<1x128xf32>
    %62 = arith.addf %40, %47 : vector<1x128xf32>
    %63 = arith.addf %54, %61 : vector<1x128xf32>
    %64 = arith.addf %62, %63 : vector<1x128xf32>
    %cst_26 = arith.constant 1.250000e-01 : f32
    %65 = vector.broadcast %cst_26 : f32 to vector<1x128xf32>
    %66 = arith.mulf %64, %65 : vector<1x128xf32>
    %c0_27 = arith.constant 0 : index
    %c0_28 = arith.constant 0 : index
    %67 = vector.load %arg6[%c0_27, %c0_28] : memref<8x128xf32, #tpu.memory_space<vmem>>, vector<1x128xf32>
    tpu.vector_store %arg6[%c0_27, %c0_28], %66 {strides = array<i32>} : memref<8x128xf32, #tpu.memory_space<vmem>>, vector<1x128xf32>,
    %c8_i32_29 = arith.constant 8 : i32
    %68 = arith.muli %arg0, %c8_i32_29 : i32
    %c1_i32 = arith.constant 1 : i32
    %69 = arith.addi %68, %c1_i32 : i32
    %cst_30 = arith.constant 0.000000e+00 : f32
    %70 = vector.broadcast %cst_30 : f32 to vector<1x128xf32>
    %cst_31 = arith.constant 0.000000e+00 : f32
    %71 = vector.broadcast %cst_31 : f32 to vector<1x128xf32>
    %cst_32 = arith.constant 0.000000e+00 : f32
    %72 = vector.broadcast %cst_32 : f32 to vector<1x128xf32>
    %cst_33 = arith.constant 0.000000e+00 : f32
    %73 = vector.broadcast %cst_33 : f32 to vector<1x128xf32>
    %74 = arith.index_cast %69 : i32 to index
    %c0_34 = arith.constant 0 : index
    %75 = memref.load %arg1[%74, %c0_34] : memref<8x8xi32, #tpu.memory_space<smem>>
    %c0_i32_35 = arith.constant 0 : i32
    %76 = arith.maxsi %75, %c0_i32_35 : i32
    %c15_i32_36 = arith.constant 15 : i32
    %77 = arith.minsi %76, %c15_i32_36 : i32
    %78 = arith.index_cast %77 : i32 to index
    %c0_37 = arith.constant 0 : index
    %79 = vector.load %arg2[%78, %c0_37] : memref<16x128xf32, #tpu.memory_space<vmem>>, vector<1x128xf32>
    %80 = arith.addf %70, %79 : vector<1x128xf32>
    %81 = arith.index_cast %69 : i32 to index
    %c1_38 = arith.constant 1 : index
    %82 = memref.load %arg1[%81, %c1_38] : memref<8x8xi32, #tpu.memory_space<smem>>
    %c0_i32_39 = arith.constant 0 : i32
    %83 = arith.maxsi %82, %c0_i32_39 : i32
    %c15_i32_40 = arith.constant 15 : i32
    %84 = arith.minsi %83, %c15_i32_40 : i32
    %85 = arith.index_cast %84 : i32 to index
    %c0_41 = arith.constant 0 : index
    %86 = vector.load %arg2[%85, %c0_41] : memref<16x128xf32, #tpu.memory_space<vmem>>, vector<1x128xf32>
    %87 = arith.addf %71, %86 : vector<1x128xf32>
    %88 = arith.index_cast %69 : i32 to index
    %c2_42 = arith.constant 2 : index
    %89 = memref.load %arg1[%88, %c2_42] : memref<8x8xi32, #tpu.memory_space<smem>>
    %c0_i32_43 = arith.constant 0 : i32
    %90 = arith.maxsi %89, %c0_i32_43 : i32
    %c15_i32_44 = arith.constant 15 : i32
    %91 = arith.minsi %90, %c15_i32_44 : i32
    %92 = arith.index_cast %91 : i32 to index
    %c0_45 = arith.constant 0 : index
    %93 = vector.load %arg2[%92, %c0_45] : memref<16x128xf32, #tpu.memory_space<vmem>>, vector<1x128xf32>
    %94 = arith.addf %72, %93 : vector<1x128xf32>
    %95 = arith.index_cast %69 : i32 to index
    %c3_46 = arith.constant 3 : index
    %96 = memref.load %arg1[%95, %c3_46] : memref<8x8xi32, #tpu.memory_space<smem>>
    %c0_i32_47 = arith.constant 0 : i32
    %97 = arith.maxsi %96, %c0_i32_47 : i32
    %c15_i32_48 = arith.constant 15 : i32
    %98 = arith.minsi %97, %c15_i32_48 : i32
    %99 = arith.index_cast %98 : i32 to index
    %c0_49 = arith.constant 0 : index
    %100 = vector.load %arg2[%99, %c0_49] : memref<16x128xf32, #tpu.memory_space<vmem>>, vector<1x128xf32>
    %101 = arith.addf %73, %100 : vector<1x128xf32>
    %102 = arith.index_cast %69 : i32 to index
    %c4_50 = arith.constant 4 : index
    %103 = memref.load %arg1[%102, %c4_50] : memref<8x8xi32, #tpu.memory_space<smem>>
    %c0_i32_51 = arith.constant 0 : i32
    %104 = arith.maxsi %103, %c0_i32_51 : i32
    %c15_i32_52 = arith.constant 15 : i32
    %105 = arith.minsi %104, %c15_i32_52 : i32
    %106 = arith.index_cast %105 : i32 to index
    %c0_53 = arith.constant 0 : index
    %107 = vector.load %arg2[%106, %c0_53] : memref<16x128xf32, #tpu.memory_space<vmem>>, vector<1x128xf32>
    %108 = arith.addf %80, %107 : vector<1x128xf32>
    %109 = arith.index_cast %69 : i32 to index
    %c5_54 = arith.constant 5 : index
    %110 = memref.load %arg1[%109, %c5_54] : memref<8x8xi32, #tpu.memory_space<smem>>
    %c0_i32_55 = arith.constant 0 : i32
    %111 = arith.maxsi %110, %c0_i32_55 : i32
    %c15_i32_56 = arith.constant 15 : i32
    %112 = arith.minsi %111, %c15_i32_56 : i32
    %113 = arith.index_cast %112 : i32 to index
    %c0_57 = arith.constant 0 : index
    %114 = vector.load %arg2[%113, %c0_57] : memref<16x128xf32, #tpu.memory_space<vmem>>, vector<1x128xf32>
    %115 = arith.addf %87, %114 : vector<1x128xf32>
    %116 = arith.index_cast %69 : i32 to index
    %c6_58 = arith.constant 6 : index
    %117 = memref.load %arg1[%116, %c6_58] : memref<8x8xi32, #tpu.memory_space<smem>>
    %c0_i32_59 = arith.constant 0 : i32
    %118 = arith.maxsi %117, %c0_i32_59 : i32
    %c15_i32_60 = arith.constant 15 : i32
    %119 = arith.minsi %118, %c15_i32_60 : i32
    %120 = arith.index_cast %119 : i32 to index
    %c0_61 = arith.constant 0 : index
    %121 = vector.load %arg2[%120, %c0_61] : memref<16x128xf32, #tpu.memory_space<vmem>>, vector<1x128xf32>
    %122 = arith.addf %94, %121 : vector<1x128xf32>
    %123 = arith.index_cast %69 : i32 to index
    %c7_62 = arith.constant 7 : index
    %124 = memref.load %arg1[%123, %c7_62] : memref<8x8xi32, #tpu.memory_space<smem>>
    %c0_i32_63 = arith.constant 0 : i32
    %125 = arith.maxsi %124, %c0_i32_63 : i32
    %c15_i32_64 = arith.constant 15 : i32
    %126 = arith.minsi %125, %c15_i32_64 : i32
    %127 = arith.index_cast %126 : i32 to index
    %c0_65 = arith.constant 0 : index
    %128 = vector.load %arg2[%127, %c0_65] : memref<16x128xf32, #tpu.memory_space<vmem>>, vector<1x128xf32>
    %129 = arith.addf %101, %128 : vector<1x128xf32>
    %130 = arith.addf %108, %115 : vector<1x128xf32>
    %131 = arith.addf %122, %129 : vector<1x128xf32>
    %132 = arith.addf %130, %131 : vector<1x128xf32>
    %cst_66 = arith.constant 1.250000e-01 : f32
    %133 = vector.broadcast %cst_66 : f32 to vector<1x128xf32>
    %134 = arith.mulf %132, %133 : vector<1x128xf32>
    %c1_67 = arith.constant 1 : index
    %c0_68 = arith.constant 0 : index
    %135 = vector.load %arg6[%c1_67, %c0_68] : memref<8x128xf32, #tpu.memory_space<vmem>>, vector<1x128xf32>
    tpu.vector_store %arg6[%c1_67, %c0_68], %134 {strides = array<i32>} : memref<8x128xf32, #tpu.memory_space<vmem>>, vector<1x128xf32>,
    %c8_i32_69 = arith.constant 8 : i32
    %136 = arith.muli %arg0, %c8_i32_69 : i32
    %c2_i32 = arith.constant 2 : i32
    %137 = arith.addi %136, %c2_i32 : i32
    %cst_70 = arith.constant 0.000000e+00 : f32
    %138 = vector.broadcast %cst_70 : f32 to vector<1x128xf32>
    %cst_71 = arith.constant 0.000000e+00 : f32
    %139 = vector.broadcast %cst_71 : f32 to vector<1x128xf32>
    %cst_72 = arith.constant 0.000000e+00 : f32
    %140 = vector.broadcast %cst_72 : f32 to vector<1x128xf32>
    %cst_73 = arith.constant 0.000000e+00 : f32
    %141 = vector.broadcast %cst_73 : f32 to vector<1x128xf32>
    %142 = arith.index_cast %137 : i32 to index
    %c0_74 = arith.constant 0 : index
    %143 = memref.load %arg1[%142, %c0_74] : memref<8x8xi32, #tpu.memory_space<smem>>
    %c0_i32_75 = arith.constant 0 : i32
    %144 = arith.maxsi %143, %c0_i32_75 : i32
    %c15_i32_76 = arith.constant 15 : i32
    %145 = arith.minsi %144, %c15_i32_76 : i32
    %146 = arith.index_cast %145 : i32 to index
    %c0_77 = arith.constant 0 : index
    %147 = vector.load %arg2[%146, %c0_77] : memref<16x128xf32, #tpu.memory_space<vmem>>, vector<1x128xf32>
    %148 = arith.addf %138, %147 : vector<1x128xf32>
    %149 = arith.index_cast %137 : i32 to index
    %c1_78 = arith.constant 1 : index
    %150 = memref.load %arg1[%149, %c1_78] : memref<8x8xi32, #tpu.memory_space<smem>>
    %c0_i32_79 = arith.constant 0 : i32
    %151 = arith.maxsi %150, %c0_i32_79 : i32
    %c15_i32_80 = arith.constant 15 : i32
    %152 = arith.minsi %151, %c15_i32_80 : i32
    %153 = arith.index_cast %152 : i32 to index
    %c0_81 = arith.constant 0 : index
    %154 = vector.load %arg2[%153, %c0_81] : memref<16x128xf32, #tpu.memory_space<vmem>>, vector<1x128xf32>
    %155 = arith.addf %139, %154 : vector<1x128xf32>
    %156 = arith.index_cast %137 : i32 to index
    %c2_82 = arith.constant 2 : index
    %157 = memref.load %arg1[%156, %c2_82] : memref<8x8xi32, #tpu.memory_space<smem>>
    %c0_i32_83 = arith.constant 0 : i32
    %158 = arith.maxsi %157, %c0_i32_83 : i32
    %c15_i32_84 = arith.constant 15 : i32
    %159 = arith.minsi %158, %c15_i32_84 : i32
    %160 = arith.index_cast %159 : i32 to index
    %c0_85 = arith.constant 0 : index
    %161 = vector.load %arg2[%160, %c0_85] : memref<16x128xf32, #tpu.memory_space<vmem>>, vector<1x128xf32>
    %162 = arith.addf %140, %161 : vector<1x128xf32>
    %163 = arith.index_cast %137 : i32 to index
    %c3_86 = arith.constant 3 : index
    %164 = memref.load %arg1[%163, %c3_86] : memref<8x8xi32, #tpu.memory_space<smem>>
    %c0_i32_87 = arith.constant 0 : i32
    %165 = arith.maxsi %164, %c0_i32_87 : i32
    %c15_i32_88 = arith.constant 15 : i32
    %166 = arith.minsi %165, %c15_i32_88 : i32
    %167 = arith.index_cast %166 : i32 to index
    %c0_89 = arith.constant 0 : index
    %168 = vector.load %arg2[%167, %c0_89] : memref<16x128xf32, #tpu.memory_space<vmem>>, vector<1x128xf32>
    %169 = arith.addf %141, %168 : vector<1x128xf32>
    %170 = arith.index_cast %137 : i32 to index
    %c4_90 = arith.constant 4 : index
    %171 = memref.load %arg1[%170, %c4_90] : memref<8x8xi32, #tpu.memory_space<smem>>
    %c0_i32_91 = arith.constant 0 : i32
    %172 = arith.maxsi %171, %c0_i32_91 : i32
    %c15_i32_92 = arith.constant 15 : i32
    %173 = arith.minsi %172, %c15_i32_92 : i32
    %174 = arith.index_cast %173 : i32 to index
    %c0_93 = arith.constant 0 : index
    %175 = vector.load %arg2[%174, %c0_93] : memref<16x128xf32, #tpu.memory_space<vmem>>, vector<1x128xf32>
    %176 = arith.addf %148, %175 : vector<1x128xf32>
    %177 = arith.index_cast %137 : i32 to index
    %c5_94 = arith.constant 5 : index
    %178 = memref.load %arg1[%177, %c5_94] : memref<8x8xi32, #tpu.memory_space<smem>>
    %c0_i32_95 = arith.constant 0 : i32
    %179 = arith.maxsi %178, %c0_i32_95 : i32
    %c15_i32_96 = arith.constant 15 : i32
    %180 = arith.minsi %179, %c15_i32_96 : i32
    %181 = arith.index_cast %180 : i32 to index
    %c0_97 = arith.constant 0 : index
    %182 = vector.load %arg2[%181, %c0_97] : memref<16x128xf32, #tpu.memory_space<vmem>>, vector<1x128xf32>
    %183 = arith.addf %155, %182 : vector<1x128xf32>
    %184 = arith.index_cast %137 : i32 to index
    %c6_98 = arith.constant 6 : index
    %185 = memref.load %arg1[%184, %c6_98] : memref<8x8xi32, #tpu.memory_space<smem>>
    %c0_i32_99 = arith.constant 0 : i32
    %186 = arith.maxsi %185, %c0_i32_99 : i32
    %c15_i32_100 = arith.constant 15 : i32
    %187 = arith.minsi %186, %c15_i32_100 : i32
    %188 = arith.index_cast %187 : i32 to index
    %c0_101 = arith.constant 0 : index
    %189 = vector.load %arg2[%188, %c0_101] : memref<16x128xf32, #tpu.memory_space<vmem>>, vector<1x128xf32>
    %190 = arith.addf %162, %189 : vector<1x128xf32>
    %191 = arith.index_cast %137 : i32 to index
    %c7_102 = arith.constant 7 : index
    %192 = memref.load %arg1[%191, %c7_102] : memref<8x8xi32, #tpu.memory_space<smem>>
    %c0_i32_103 = arith.constant 0 : i32
    %193 = arith.maxsi %192, %c0_i32_103 : i32
    %c15_i32_104 = arith.constant 15 : i32
    %194 = arith.minsi %193, %c15_i32_104 : i32
    %195 = arith.index_cast %194 : i32 to index
    %c0_105 = arith.constant 0 : index
    %196 = vector.load %arg2[%195, %c0_105] : memref<16x128xf32, #tpu.memory_space<vmem>>, vector<1x128xf32>
    %197 = arith.addf %169, %196 : vector<1x128xf32>
    %198 = arith.addf %176, %183 : vector<1x128xf32>
    %199 = arith.addf %190, %197 : vector<1x128xf32>
    %200 = arith.addf %198, %199 : vector<1x128xf32>
    %cst_106 = arith.constant 1.250000e-01 : f32
    %201 = vector.broadcast %cst_106 : f32 to vector<1x128xf32>
    %202 = arith.mulf %200, %201 : vector<1x128xf32>
    %c2_107 = arith.constant 2 : index
    %c0_108 = arith.constant 0 : index
    %203 = vector.load %arg6[%c2_107, %c0_108] : memref<8x128xf32, #tpu.memory_space<vmem>>, vector<1x128xf32>
    tpu.vector_store %arg6[%c2_107, %c0_108], %202 {strides = array<i32>} : memref<8x128xf32, #tpu.memory_space<vmem>>, vector<1x128xf32>,
    %c8_i32_109 = arith.constant 8 : i32
    %204 = arith.muli %arg0, %c8_i32_109 : i32
    %c3_i32 = arith.constant 3 : i32
    %205 = arith.addi %204, %c3_i32 : i32
    %cst_110 = arith.constant 0.000000e+00 : f32
    %206 = vector.broadcast %cst_110 : f32 to vector<1x128xf32>
    %cst_111 = arith.constant 0.000000e+00 : f32
    %207 = vector.broadcast %cst_111 : f32 to vector<1x128xf32>
    %cst_112 = arith.constant 0.000000e+00 : f32
    %208 = vector.broadcast %cst_112 : f32 to vector<1x128xf32>
    %cst_113 = arith.constant 0.000000e+00 : f32
    %209 = vector.broadcast %cst_113 : f32 to vector<1x128xf32>
    %210 = arith.index_cast %205 : i32 to index
    %c0_114 = arith.constant 0 : index
    %211 = memref.load %arg1[%210, %c0_114] : memref<8x8xi32, #tpu.memory_space<smem>>
    %c0_i32_115 = arith.constant 0 : i32
    %212 = arith.maxsi %211, %c0_i32_115 : i32
    %c15_i32_116 = arith.constant 15 : i32
    %213 = arith.minsi %212, %c15_i32_116 : i32
    %214 = arith.index_cast %213 : i32 to index
    %c0_117 = arith.constant 0 : index
    %215 = vector.load %arg2[%214, %c0_117] : memref<16x128xf32, #tpu.memory_space<vmem>>, vector<1x128xf32>
    %216 = arith.addf %206, %215 : vector<1x128xf32>
    %217 = arith.index_cast %205 : i32 to index
    %c1_118 = arith.constant 1 : index
    %218 = memref.load %arg1[%217, %c1_118] : memref<8x8xi32, #tpu.memory_space<smem>>
    %c0_i32_119 = arith.constant 0 : i32
    %219 = arith.maxsi %218, %c0_i32_119 : i32
    %c15_i32_120 = arith.constant 15 : i32
    %220 = arith.minsi %219, %c15_i32_120 : i32
    %221 = arith.index_cast %220 : i32 to index
    %c0_121 = arith.constant 0 : index
    %222 = vector.load %arg2[%221, %c0_121] : memref<16x128xf32, #tpu.memory_space<vmem>>, vector<1x128xf32>
    %223 = arith.addf %207, %222 : vector<1x128xf32>
    %224 = arith.index_cast %205 : i32 to index
    %c2_122 = arith.constant 2 : index
    %225 = memref.load %arg1[%224, %c2_122] : memref<8x8xi32, #tpu.memory_space<smem>>
    %c0_i32_123 = arith.constant 0 : i32
    %226 = arith.maxsi %225, %c0_i32_123 : i32
    %c15_i32_124 = arith.constant 15 : i32
    %227 = arith.minsi %226, %c15_i32_124 : i32
    %228 = arith.index_cast %227 : i32 to index
    %c0_125 = arith.constant 0 : index
    %229 = vector.load %arg2[%228, %c0_125] : memref<16x128xf32, #tpu.memory_space<vmem>>, vector<1x128xf32>
    %230 = arith.addf %208, %229 : vector<1x128xf32>
    %231 = arith.index_cast %205 : i32 to index
    %c3_126 = arith.constant 3 : index
    %232 = memref.load %arg1[%231, %c3_126] : memref<8x8xi32, #tpu.memory_space<smem>>
    %c0_i32_127 = arith.constant 0 : i32
    %233 = arith.maxsi %232, %c0_i32_127 : i32
    %c15_i32_128 = arith.constant 15 : i32
    %234 = arith.minsi %233, %c15_i32_128 : i32
    %235 = arith.index_cast %234 : i32 to index
    %c0_129 = arith.constant 0 : index
    %236 = vector.load %arg2[%235, %c0_129] : memref<16x128xf32, #tpu.memory_space<vmem>>, vector<1x128xf32>
    %237 = arith.addf %209, %236 : vector<1x128xf32>
    %238 = arith.index_cast %205 : i32 to index
    %c4_130 = arith.constant 4 : index
    %239 = memref.load %arg1[%238, %c4_130] : memref<8x8xi32, #tpu.memory_space<smem>>
    %c0_i32_131 = arith.constant 0 : i32
    %240 = arith.maxsi %239, %c0_i32_131 : i32
    %c15_i32_132 = arith.constant 15 : i32
    %241 = arith.minsi %240, %c15_i32_132 : i32
    %242 = arith.index_cast %241 : i32 to index
    %c0_133 = arith.constant 0 : index
    %243 = vector.load %arg2[%242, %c0_133] : memref<16x128xf32, #tpu.memory_space<vmem>>, vector<1x128xf32>
    %244 = arith.addf %216, %243 : vector<1x128xf32>
    %245 = arith.index_cast %205 : i32 to index
    %c5_134 = arith.constant 5 : index
    %246 = memref.load %arg1[%245, %c5_134] : memref<8x8xi32, #tpu.memory_space<smem>>
    %c0_i32_135 = arith.constant 0 : i32
    %247 = arith.maxsi %246, %c0_i32_135 : i32
    %c15_i32_136 = arith.constant 15 : i32
    %248 = arith.minsi %247, %c15_i32_136 : i32
    %249 = arith.index_cast %248 : i32 to index
    %c0_137 = arith.constant 0 : index
    %250 = vector.load %arg2[%249, %c0_137] : memref<16x128xf32, #tpu.memory_space<vmem>>, vector<1x128xf32>
    %251 = arith.addf %223, %250 : vector<1x128xf32>
    %252 = arith.index_cast %205 : i32 to index
    %c6_138 = arith.constant 6 : index
    %253 = memref.load %arg1[%252, %c6_138] : memref<8x8xi32, #tpu.memory_space<smem>>
    %c0_i32_139 = arith.constant 0 : i32
    %254 = arith.maxsi %253, %c0_i32_139 : i32
    %c15_i32_140 = arith.constant 15 : i32
    %255 = arith.minsi %254, %c15_i32_140 : i32
    %256 = arith.index_cast %255 : i32 to index
    %c0_141 = arith.constant 0 : index
    %257 = vector.load %arg2[%256, %c0_141] : memref<16x128xf32, #tpu.memory_space<vmem>>, vector<1x128xf32>
    %258 = arith.addf %230, %257 : vector<1x128xf32>
    %259 = arith.index_cast %205 : i32 to index
    %c7_142 = arith.constant 7 : index
    %260 = memref.load %arg1[%259, %c7_142] : memref<8x8xi32, #tpu.memory_space<smem>>
    %c0_i32_143 = arith.constant 0 : i32
    %261 = arith.maxsi %260, %c0_i32_143 : i32
    %c15_i32_144 = arith.constant 15 : i32
    %262 = arith.minsi %261, %c15_i32_144 : i32
    %263 = arith.index_cast %262 : i32 to index
    %c0_145 = arith.constant 0 : index
    %264 = vector.load %arg2[%263, %c0_145] : memref<16x128xf32, #tpu.memory_space<vmem>>, vector<1x128xf32>
    %265 = arith.addf %237, %264 : vector<1x128xf32>
    %266 = arith.addf %244, %251 : vector<1x128xf32>
    %267 = arith.addf %258, %265 : vector<1x128xf32>
    %268 = arith.addf %266, %267 : vector<1x128xf32>
    %cst_146 = arith.constant 1.250000e-01 : f32
    %269 = vector.broadcast %cst_146 : f32 to vector<1x128xf32>
    %270 = arith.mulf %268, %269 : vector<1x128xf32>
    %c3_147 = arith.constant 3 : index
    %c0_148 = arith.constant 0 : index
    %271 = vector.load %arg6[%c3_147, %c0_148] : memref<8x128xf32, #tpu.memory_space<vmem>>, vector<1x128xf32>
    tpu.vector_store %arg6[%c3_147, %c0_148], %270 {strides = array<i32>} : memref<8x128xf32, #tpu.memory_space<vmem>>, vector<1x128xf32>,
    %c8_i32_149 = arith.constant 8 : i32
    %272 = arith.muli %arg0, %c8_i32_149 : i32
    %c4_i32 = arith.constant 4 : i32
    %273 = arith.addi %272, %c4_i32 : i32
    %cst_150 = arith.constant 0.000000e+00 : f32
    %274 = vector.broadcast %cst_150 : f32 to vector<1x128xf32>
    %cst_151 = arith.constant 0.000000e+00 : f32
    %275 = vector.broadcast %cst_151 : f32 to vector<1x128xf32>
    %cst_152 = arith.constant 0.000000e+00 : f32
    %276 = vector.broadcast %cst_152 : f32 to vector<1x128xf32>
    %cst_153 = arith.constant 0.000000e+00 : f32
    %277 = vector.broadcast %cst_153 : f32 to vector<1x128xf32>
    %278 = arith.index_cast %273 : i32 to index
    %c0_154 = arith.constant 0 : index
    %279 = memref.load %arg1[%278, %c0_154] : memref<8x8xi32, #tpu.memory_space<smem>>
    %c0_i32_155 = arith.constant 0 : i32
    %280 = arith.maxsi %279, %c0_i32_155 : i32
    %c15_i32_156 = arith.constant 15 : i32
    %281 = arith.minsi %280, %c15_i32_156 : i32
    %282 = arith.index_cast %281 : i32 to index
    %c0_157 = arith.constant 0 : index
    %283 = vector.load %arg2[%282, %c0_157] : memref<16x128xf32, #tpu.memory_space<vmem>>, vector<1x128xf32>
    %284 = arith.addf %274, %283 : vector<1x128xf32>
    %285 = arith.index_cast %273 : i32 to index
    %c1_158 = arith.constant 1 : index
    %286 = memref.load %arg1[%285, %c1_158] : memref<8x8xi32, #tpu.memory_space<smem>>
    %c0_i32_159 = arith.constant 0 : i32
    %287 = arith.maxsi %286, %c0_i32_159 : i32
    %c15_i32_160 = arith.constant 15 : i32
    %288 = arith.minsi %287, %c15_i32_160 : i32
    %289 = arith.index_cast %288 : i32 to index
    %c0_161 = arith.constant 0 : index
    %290 = vector.load %arg2[%289, %c0_161] : memref<16x128xf32, #tpu.memory_space<vmem>>, vector<1x128xf32>
    %291 = arith.addf %275, %290 : vector<1x128xf32>
    %292 = arith.index_cast %273 : i32 to index
    %c2_162 = arith.constant 2 : index
    %293 = memref.load %arg1[%292, %c2_162] : memref<8x8xi32, #tpu.memory_space<smem>>
    %c0_i32_163 = arith.constant 0 : i32
    %294 = arith.maxsi %293, %c0_i32_163 : i32
    %c15_i32_164 = arith.constant 15 : i32
    %295 = arith.minsi %294, %c15_i32_164 : i32
    %296 = arith.index_cast %295 : i32 to index
    %c0_165 = arith.constant 0 : index
    %297 = vector.load %arg2[%296, %c0_165] : memref<16x128xf32, #tpu.memory_space<vmem>>, vector<1x128xf32>
    %298 = arith.addf %276, %297 : vector<1x128xf32>
    %299 = arith.index_cast %273 : i32 to index
    %c3_166 = arith.constant 3 : index
    %300 = memref.load %arg1[%299, %c3_166] : memref<8x8xi32, #tpu.memory_space<smem>>
    %c0_i32_167 = arith.constant 0 : i32
    %301 = arith.maxsi %300, %c0_i32_167 : i32
    %c15_i32_168 = arith.constant 15 : i32
    %302 = arith.minsi %301, %c15_i32_168 : i32
    %303 = arith.index_cast %302 : i32 to index
    %c0_169 = arith.constant 0 : index
    %304 = vector.load %arg2[%303, %c0_169] : memref<16x128xf32, #tpu.memory_space<vmem>>, vector<1x128xf32>
    %305 = arith.addf %277, %304 : vector<1x128xf32>
    %306 = arith.index_cast %273 : i32 to index
    %c4_170 = arith.constant 4 : index
    %307 = memref.load %arg1[%306, %c4_170] : memref<8x8xi32, #tpu.memory_space<smem>>
    %c0_i32_171 = arith.constant 0 : i32
    %308 = arith.maxsi %307, %c0_i32_171 : i32
    %c15_i32_172 = arith.constant 15 : i32
    %309 = arith.minsi %308, %c15_i32_172 : i32
    %310 = arith.index_cast %309 : i32 to index
    %c0_173 = arith.constant 0 : index
    %311 = vector.load %arg2[%310, %c0_173] : memref<16x128xf32, #tpu.memory_space<vmem>>, vector<1x128xf32>
    %312 = arith.addf %284, %311 : vector<1x128xf32>
    %313 = arith.index_cast %273 : i32 to index
    %c5_174 = arith.constant 5 : index
    %314 = memref.load %arg1[%313, %c5_174] : memref<8x8xi32, #tpu.memory_space<smem>>
    %c0_i32_175 = arith.constant 0 : i32
    %315 = arith.maxsi %314, %c0_i32_175 : i32
    %c15_i32_176 = arith.constant 15 : i32
    %316 = arith.minsi %315, %c15_i32_176 : i32
    %317 = arith.index_cast %316 : i32 to index
    %c0_177 = arith.constant 0 : index
    %318 = vector.load %arg2[%317, %c0_177] : memref<16x128xf32, #tpu.memory_space<vmem>>, vector<1x128xf32>
    %319 = arith.addf %291, %318 : vector<1x128xf32>
    %320 = arith.index_cast %273 : i32 to index
    %c6_178 = arith.constant 6 : index
    %321 = memref.load %arg1[%320, %c6_178] : memref<8x8xi32, #tpu.memory_space<smem>>
    %c0_i32_179 = arith.constant 0 : i32
    %322 = arith.maxsi %321, %c0_i32_179 : i32
    %c15_i32_180 = arith.constant 15 : i32
    %323 = arith.minsi %322, %c15_i32_180 : i32
    %324 = arith.index_cast %323 : i32 to index
    %c0_181 = arith.constant 0 : index
    %325 = vector.load %arg2[%324, %c0_181] : memref<16x128xf32, #tpu.memory_space<vmem>>, vector<1x128xf32>
    %326 = arith.addf %298, %325 : vector<1x128xf32>
    %327 = arith.index_cast %273 : i32 to index
    %c7_182 = arith.constant 7 : index
    %328 = memref.load %arg1[%327, %c7_182] : memref<8x8xi32, #tpu.memory_space<smem>>
    %c0_i32_183 = arith.constant 0 : i32
    %329 = arith.maxsi %328, %c0_i32_183 : i32
    %c15_i32_184 = arith.constant 15 : i32
    %330 = arith.minsi %329, %c15_i32_184 : i32
    %331 = arith.index_cast %330 : i32 to index
    %c0_185 = arith.constant 0 : index
    %332 = vector.load %arg2[%331, %c0_185] : memref<16x128xf32, #tpu.memory_space<vmem>>, vector<1x128xf32>
    %333 = arith.addf %305, %332 : vector<1x128xf32>
    %334 = arith.addf %312, %319 : vector<1x128xf32>
    %335 = arith.addf %326, %333 : vector<1x128xf32>
    %336 = arith.addf %334, %335 : vector<1x128xf32>
    %cst_186 = arith.constant 1.250000e-01 : f32
    %337 = vector.broadcast %cst_186 : f32 to vector<1x128xf32>
    %338 = arith.mulf %336, %337 : vector<1x128xf32>
    %c4_187 = arith.constant 4 : index
    %c0_188 = arith.constant 0 : index
    %339 = vector.load %arg6[%c4_187, %c0_188] : memref<8x128xf32, #tpu.memory_space<vmem>>, vector<1x128xf32>
    tpu.vector_store %arg6[%c4_187, %c0_188], %338 {strides = array<i32>} : memref<8x128xf32, #tpu.memory_space<vmem>>, vector<1x128xf32>,
    %c8_i32_189 = arith.constant 8 : i32
    %340 = arith.muli %arg0, %c8_i32_189 : i32
    %c5_i32 = arith.constant 5 : i32
    %341 = arith.addi %340, %c5_i32 : i32
    %cst_190 = arith.constant 0.000000e+00 : f32
    %342 = vector.broadcast %cst_190 : f32 to vector<1x128xf32>
    %cst_191 = arith.constant 0.000000e+00 : f32
    %343 = vector.broadcast %cst_191 : f32 to vector<1x128xf32>
    %cst_192 = arith.constant 0.000000e+00 : f32
    %344 = vector.broadcast %cst_192 : f32 to vector<1x128xf32>
    %cst_193 = arith.constant 0.000000e+00 : f32
    %345 = vector.broadcast %cst_193 : f32 to vector<1x128xf32>
    %346 = arith.index_cast %341 : i32 to index
    %c0_194 = arith.constant 0 : index
    %347 = memref.load %arg1[%346, %c0_194] : memref<8x8xi32, #tpu.memory_space<smem>>
    %c0_i32_195 = arith.constant 0 : i32
    %348 = arith.maxsi %347, %c0_i32_195 : i32
    %c15_i32_196 = arith.constant 15 : i32
    %349 = arith.minsi %348, %c15_i32_196 : i32
    %350 = arith.index_cast %349 : i32 to index
    %c0_197 = arith.constant 0 : index
    %351 = vector.load %arg2[%350, %c0_197] : memref<16x128xf32, #tpu.memory_space<vmem>>, vector<1x128xf32>
    %352 = arith.addf %342, %351 : vector<1x128xf32>
    %353 = arith.index_cast %341 : i32 to index
    %c1_198 = arith.constant 1 : index
    %354 = memref.load %arg1[%353, %c1_198] : memref<8x8xi32, #tpu.memory_space<smem>>
    %c0_i32_199 = arith.constant 0 : i32
    %355 = arith.maxsi %354, %c0_i32_199 : i32
    %c15_i32_200 = arith.constant 15 : i32
    %356 = arith.minsi %355, %c15_i32_200 : i32
    %357 = arith.index_cast %356 : i32 to index
    %c0_201 = arith.constant 0 : index
    %358 = vector.load %arg2[%357, %c0_201] : memref<16x128xf32, #tpu.memory_space<vmem>>, vector<1x128xf32>
    %359 = arith.addf %343, %358 : vector<1x128xf32>
    %360 = arith.index_cast %341 : i32 to index
    %c2_202 = arith.constant 2 : index
    %361 = memref.load %arg1[%360, %c2_202] : memref<8x8xi32, #tpu.memory_space<smem>>
    %c0_i32_203 = arith.constant 0 : i32
    %362 = arith.maxsi %361, %c0_i32_203 : i32
    %c15_i32_204 = arith.constant 15 : i32
    %363 = arith.minsi %362, %c15_i32_204 : i32
    %364 = arith.index_cast %363 : i32 to index
    %c0_205 = arith.constant 0 : index
    %365 = vector.load %arg2[%364, %c0_205] : memref<16x128xf32, #tpu.memory_space<vmem>>, vector<1x128xf32>
    %366 = arith.addf %344, %365 : vector<1x128xf32>
    %367 = arith.index_cast %341 : i32 to index
    %c3_206 = arith.constant 3 : index
    %368 = memref.load %arg1[%367, %c3_206] : memref<8x8xi32, #tpu.memory_space<smem>>
    %c0_i32_207 = arith.constant 0 : i32
    %369 = arith.maxsi %368, %c0_i32_207 : i32
    %c15_i32_208 = arith.constant 15 : i32
    %370 = arith.minsi %369, %c15_i32_208 : i32
    %371 = arith.index_cast %370 : i32 to index
    %c0_209 = arith.constant 0 : index
    %372 = vector.load %arg2[%371, %c0_209] : memref<16x128xf32, #tpu.memory_space<vmem>>, vector<1x128xf32>
    %373 = arith.addf %345, %372 : vector<1x128xf32>
    %374 = arith.index_cast %341 : i32 to index
    %c4_210 = arith.constant 4 : index
    %375 = memref.load %arg1[%374, %c4_210] : memref<8x8xi32, #tpu.memory_space<smem>>
    %c0_i32_211 = arith.constant 0 : i32
    %376 = arith.maxsi %375, %c0_i32_211 : i32
    %c15_i32_212 = arith.constant 15 : i32
    %377 = arith.minsi %376, %c15_i32_212 : i32
    %378 = arith.index_cast %377 : i32 to index
    %c0_213 = arith.constant 0 : index
    %379 = vector.load %arg2[%378, %c0_213] : memref<16x128xf32, #tpu.memory_space<vmem>>, vector<1x128xf32>
    %380 = arith.addf %352, %379 : vector<1x128xf32>
    %381 = arith.index_cast %341 : i32 to index
    %c5_214 = arith.constant 5 : index
    %382 = memref.load %arg1[%381, %c5_214] : memref<8x8xi32, #tpu.memory_space<smem>>
    %c0_i32_215 = arith.constant 0 : i32
    %383 = arith.maxsi %382, %c0_i32_215 : i32
    %c15_i32_216 = arith.constant 15 : i32
    %384 = arith.minsi %383, %c15_i32_216 : i32
    %385 = arith.index_cast %384 : i32 to index
    %c0_217 = arith.constant 0 : index
    %386 = vector.load %arg2[%385, %c0_217] : memref<16x128xf32, #tpu.memory_space<vmem>>, vector<1x128xf32>
    %387 = arith.addf %359, %386 : vector<1x128xf32>
    %388 = arith.index_cast %341 : i32 to index
    %c6_218 = arith.constant 6 : index
    %389 = memref.load %arg1[%388, %c6_218] : memref<8x8xi32, #tpu.memory_space<smem>>
    %c0_i32_219 = arith.constant 0 : i32
    %390 = arith.maxsi %389, %c0_i32_219 : i32
    %c15_i32_220 = arith.constant 15 : i32
    %391 = arith.minsi %390, %c15_i32_220 : i32
    %392 = arith.index_cast %391 : i32 to index
    %c0_221 = arith.constant 0 : index
    %393 = vector.load %arg2[%392, %c0_221] : memref<16x128xf32, #tpu.memory_space<vmem>>, vector<1x128xf32>
    %394 = arith.addf %366, %393 : vector<1x128xf32>
    %395 = arith.index_cast %341 : i32 to index
    %c7_222 = arith.constant 7 : index
    %396 = memref.load %arg1[%395, %c7_222] : memref<8x8xi32, #tpu.memory_space<smem>>
    %c0_i32_223 = arith.constant 0 : i32
    %397 = arith.maxsi %396, %c0_i32_223 : i32
    %c15_i32_224 = arith.constant 15 : i32
    %398 = arith.minsi %397, %c15_i32_224 : i32
    %399 = arith.index_cast %398 : i32 to index
    %c0_225 = arith.constant 0 : index
    %400 = vector.load %arg2[%399, %c0_225] : memref<16x128xf32, #tpu.memory_space<vmem>>, vector<1x128xf32>
    %401 = arith.addf %373, %400 : vector<1x128xf32>
    %402 = arith.addf %380, %387 : vector<1x128xf32>
    %403 = arith.addf %394, %401 : vector<1x128xf32>
    %404 = arith.addf %402, %403 : vector<1x128xf32>
    %cst_226 = arith.constant 1.250000e-01 : f32
    %405 = vector.broadcast %cst_226 : f32 to vector<1x128xf32>
    %406 = arith.mulf %404, %405 : vector<1x128xf32>
    %c5_227 = arith.constant 5 : index
    %c0_228 = arith.constant 0 : index
    %407 = vector.load %arg6[%c5_227, %c0_228] : memref<8x128xf32, #tpu.memory_space<vmem>>, vector<1x128xf32>
    tpu.vector_store %arg6[%c5_227, %c0_228], %406 {strides = array<i32>} : memref<8x128xf32, #tpu.memory_space<vmem>>, vector<1x128xf32>,
    %c8_i32_229 = arith.constant 8 : i32
    %408 = arith.muli %arg0, %c8_i32_229 : i32
    %c6_i32 = arith.constant 6 : i32
    %409 = arith.addi %408, %c6_i32 : i32
    %cst_230 = arith.constant 0.000000e+00 : f32
    %410 = vector.broadcast %cst_230 : f32 to vector<1x128xf32>
    %cst_231 = arith.constant 0.000000e+00 : f32
    %411 = vector.broadcast %cst_231 : f32 to vector<1x128xf32>
    %cst_232 = arith.constant 0.000000e+00 : f32
    %412 = vector.broadcast %cst_232 : f32 to vector<1x128xf32>
    %cst_233 = arith.constant 0.000000e+00 : f32
    %413 = vector.broadcast %cst_233 : f32 to vector<1x128xf32>
    %414 = arith.index_cast %409 : i32 to index
    %c0_234 = arith.constant 0 : index
    %415 = memref.load %arg1[%414, %c0_234] : memref<8x8xi32, #tpu.memory_space<smem>>
    %c0_i32_235 = arith.constant 0 : i32
    %416 = arith.maxsi %415, %c0_i32_235 : i32
    %c15_i32_236 = arith.constant 15 : i32
    %417 = arith.minsi %416, %c15_i32_236 : i32
    %418 = arith.index_cast %417 : i32 to index
    %c0_237 = arith.constant 0 : index
    %419 = vector.load %arg2[%418, %c0_237] : memref<16x128xf32, #tpu.memory_space<vmem>>, vector<1x128xf32>
    %420 = arith.addf %410, %419 : vector<1x128xf32>
    %421 = arith.index_cast %409 : i32 to index
    %c1_238 = arith.constant 1 : index
    %422 = memref.load %arg1[%421, %c1_238] : memref<8x8xi32, #tpu.memory_space<smem>>
    %c0_i32_239 = arith.constant 0 : i32
    %423 = arith.maxsi %422, %c0_i32_239 : i32
    %c15_i32_240 = arith.constant 15 : i32
    %424 = arith.minsi %423, %c15_i32_240 : i32
    %425 = arith.index_cast %424 : i32 to index
    %c0_241 = arith.constant 0 : index
    %426 = vector.load %arg2[%425, %c0_241] : memref<16x128xf32, #tpu.memory_space<vmem>>, vector<1x128xf32>
    %427 = arith.addf %411, %426 : vector<1x128xf32>
    %428 = arith.index_cast %409 : i32 to index
    %c2_242 = arith.constant 2 : index
    %429 = memref.load %arg1[%428, %c2_242] : memref<8x8xi32, #tpu.memory_space<smem>>
    %c0_i32_243 = arith.constant 0 : i32
    %430 = arith.maxsi %429, %c0_i32_243 : i32
    %c15_i32_244 = arith.constant 15 : i32
    %431 = arith.minsi %430, %c15_i32_244 : i32
    %432 = arith.index_cast %431 : i32 to index
    %c0_245 = arith.constant 0 : index
    %433 = vector.load %arg2[%432, %c0_245] : memref<16x128xf32, #tpu.memory_space<vmem>>, vector<1x128xf32>
    %434 = arith.addf %412, %433 : vector<1x128xf32>
    %435 = arith.index_cast %409 : i32 to index
    %c3_246 = arith.constant 3 : index
    %436 = memref.load %arg1[%435, %c3_246] : memref<8x8xi32, #tpu.memory_space<smem>>
    %c0_i32_247 = arith.constant 0 : i32
    %437 = arith.maxsi %436, %c0_i32_247 : i32
    %c15_i32_248 = arith.constant 15 : i32
    %438 = arith.minsi %437, %c15_i32_248 : i32
    %439 = arith.index_cast %438 : i32 to index
    %c0_249 = arith.constant 0 : index
    %440 = vector.load %arg2[%439, %c0_249] : memref<16x128xf32, #tpu.memory_space<vmem>>, vector<1x128xf32>
    %441 = arith.addf %413, %440 : vector<1x128xf32>
    %442 = arith.index_cast %409 : i32 to index
    %c4_250 = arith.constant 4 : index
    %443 = memref.load %arg1[%442, %c4_250] : memref<8x8xi32, #tpu.memory_space<smem>>
    %c0_i32_251 = arith.constant 0 : i32
    %444 = arith.maxsi %443, %c0_i32_251 : i32
    %c15_i32_252 = arith.constant 15 : i32
    %445 = arith.minsi %444, %c15_i32_252 : i32
    %446 = arith.index_cast %445 : i32 to index
    %c0_253 = arith.constant 0 : index
    %447 = vector.load %arg2[%446, %c0_253] : memref<16x128xf32, #tpu.memory_space<vmem>>, vector<1x128xf32>
    %448 = arith.addf %420, %447 : vector<1x128xf32>
    %449 = arith.index_cast %409 : i32 to index
    %c5_254 = arith.constant 5 : index
    %450 = memref.load %arg1[%449, %c5_254] : memref<8x8xi32, #tpu.memory_space<smem>>
    %c0_i32_255 = arith.constant 0 : i32
    %451 = arith.maxsi %450, %c0_i32_255 : i32
    %c15_i32_256 = arith.constant 15 : i32
    %452 = arith.minsi %451, %c15_i32_256 : i32
    %453 = arith.index_cast %452 : i32 to index
    %c0_257 = arith.constant 0 : index
    %454 = vector.load %arg2[%453, %c0_257] : memref<16x128xf32, #tpu.memory_space<vmem>>, vector<1x128xf32>
    %455 = arith.addf %427, %454 : vector<1x128xf32>
    %456 = arith.index_cast %409 : i32 to index
    %c6_258 = arith.constant 6 : index
    %457 = memref.load %arg1[%456, %c6_258] : memref<8x8xi32, #tpu.memory_space<smem>>
    %c0_i32_259 = arith.constant 0 : i32
    %458 = arith.maxsi %457, %c0_i32_259 : i32
    %c15_i32_260 = arith.constant 15 : i32
    %459 = arith.minsi %458, %c15_i32_260 : i32
    %460 = arith.index_cast %459 : i32 to index
    %c0_261 = arith.constant 0 : index
    %461 = vector.load %arg2[%460, %c0_261] : memref<16x128xf32, #tpu.memory_space<vmem>>, vector<1x128xf32>
    %462 = arith.addf %434, %461 : vector<1x128xf32>
    %463 = arith.index_cast %409 : i32 to index
    %c7_262 = arith.constant 7 : index
    %464 = memref.load %arg1[%463, %c7_262] : memref<8x8xi32, #tpu.memory_space<smem>>
    %c0_i32_263 = arith.constant 0 : i32
    %465 = arith.maxsi %464, %c0_i32_263 : i32
    %c15_i32_264 = arith.constant 15 : i32
    %466 = arith.minsi %465, %c15_i32_264 : i32
    %467 = arith.index_cast %466 : i32 to index
    %c0_265 = arith.constant 0 : index
    %468 = vector.load %arg2[%467, %c0_265] : memref<16x128xf32, #tpu.memory_space<vmem>>, vector<1x128xf32>
    %469 = arith.addf %441, %468 : vector<1x128xf32>
    %470 = arith.addf %448, %455 : vector<1x128xf32>
    %471 = arith.addf %462, %469 : vector<1x128xf32>
    %472 = arith.addf %470, %471 : vector<1x128xf32>
    %cst_266 = arith.constant 1.250000e-01 : f32
    %473 = vector.broadcast %cst_266 : f32 to vector<1x128xf32>
    %474 = arith.mulf %472, %473 : vector<1x128xf32>
    %c6_267 = arith.constant 6 : index
    %c0_268 = arith.constant 0 : index
    %475 = vector.load %arg6[%c6_267, %c0_268] : memref<8x128xf32, #tpu.memory_space<vmem>>, vector<1x128xf32>
    tpu.vector_store %arg6[%c6_267, %c0_268], %474 {strides = array<i32>} : memref<8x128xf32, #tpu.memory_space<vmem>>, vector<1x128xf32>,
    %c8_i32_269 = arith.constant 8 : i32
    %476 = arith.muli %arg0, %c8_i32_269 : i32
    %c7_i32 = arith.constant 7 : i32
    %477 = arith.addi %476, %c7_i32 : i32
    %cst_270 = arith.constant 0.000000e+00 : f32
    %478 = vector.broadcast %cst_270 : f32 to vector<1x128xf32>
    %cst_271 = arith.constant 0.000000e+00 : f32
    %479 = vector.broadcast %cst_271 : f32 to vector<1x128xf32>
    %cst_272 = arith.constant 0.000000e+00 : f32
    %480 = vector.broadcast %cst_272 : f32 to vector<1x128xf32>
    %cst_273 = arith.constant 0.000000e+00 : f32
    %481 = vector.broadcast %cst_273 : f32 to vector<1x128xf32>
    %482 = arith.index_cast %477 : i32 to index
    %c0_274 = arith.constant 0 : index
    %483 = memref.load %arg1[%482, %c0_274] : memref<8x8xi32, #tpu.memory_space<smem>>
    %c0_i32_275 = arith.constant 0 : i32
    %484 = arith.maxsi %483, %c0_i32_275 : i32
    %c15_i32_276 = arith.constant 15 : i32
    %485 = arith.minsi %484, %c15_i32_276 : i32
    %486 = arith.index_cast %485 : i32 to index
    %c0_277 = arith.constant 0 : index
    %487 = vector.load %arg2[%486, %c0_277] : memref<16x128xf32, #tpu.memory_space<vmem>>, vector<1x128xf32>
    %488 = arith.addf %478, %487 : vector<1x128xf32>
    %489 = arith.index_cast %477 : i32 to index
    %c1_278 = arith.constant 1 : index
    %490 = memref.load %arg1[%489, %c1_278] : memref<8x8xi32, #tpu.memory_space<smem>>
    %c0_i32_279 = arith.constant 0 : i32
    %491 = arith.maxsi %490, %c0_i32_279 : i32
    %c15_i32_280 = arith.constant 15 : i32
    %492 = arith.minsi %491, %c15_i32_280 : i32
    %493 = arith.index_cast %492 : i32 to index
    %c0_281 = arith.constant 0 : index
    %494 = vector.load %arg2[%493, %c0_281] : memref<16x128xf32, #tpu.memory_space<vmem>>, vector<1x128xf32>
    %495 = arith.addf %479, %494 : vector<1x128xf32>
    %496 = arith.index_cast %477 : i32 to index
    %c2_282 = arith.constant 2 : index
    %497 = memref.load %arg1[%496, %c2_282] : memref<8x8xi32, #tpu.memory_space<smem>>
    %c0_i32_283 = arith.constant 0 : i32
    %498 = arith.maxsi %497, %c0_i32_283 : i32
    %c15_i32_284 = arith.constant 15 : i32
    %499 = arith.minsi %498, %c15_i32_284 : i32
    %500 = arith.index_cast %499 : i32 to index
    %c0_285 = arith.constant 0 : index
    %501 = vector.load %arg2[%500, %c0_285] : memref<16x128xf32, #tpu.memory_space<vmem>>, vector<1x128xf32>
    %502 = arith.addf %480, %501 : vector<1x128xf32>
    %503 = arith.index_cast %477 : i32 to index
    %c3_286 = arith.constant 3 : index
    %504 = memref.load %arg1[%503, %c3_286] : memref<8x8xi32, #tpu.memory_space<smem>>
    %c0_i32_287 = arith.constant 0 : i32
    %505 = arith.maxsi %504, %c0_i32_287 : i32
    %c15_i32_288 = arith.constant 15 : i32
    %506 = arith.minsi %505, %c15_i32_288 : i32
    %507 = arith.index_cast %506 : i32 to index
    %c0_289 = arith.constant 0 : index
    %508 = vector.load %arg2[%507, %c0_289] : memref<16x128xf32, #tpu.memory_space<vmem>>, vector<1x128xf32>
    %509 = arith.addf %481, %508 : vector<1x128xf32>
    %510 = arith.index_cast %477 : i32 to index
    %c4_290 = arith.constant 4 : index
    %511 = memref.load %arg1[%510, %c4_290] : memref<8x8xi32, #tpu.memory_space<smem>>
    %c0_i32_291 = arith.constant 0 : i32
    %512 = arith.maxsi %511, %c0_i32_291 : i32
    %c15_i32_292 = arith.constant 15 : i32
    %513 = arith.minsi %512, %c15_i32_292 : i32
    %514 = arith.index_cast %513 : i32 to index
    %c0_293 = arith.constant 0 : index
    %515 = vector.load %arg2[%514, %c0_293] : memref<16x128xf32, #tpu.memory_space<vmem>>, vector<1x128xf32>
    %516 = arith.addf %488, %515 : vector<1x128xf32>
    %517 = arith.index_cast %477 : i32 to index
    %c5_294 = arith.constant 5 : index
    %518 = memref.load %arg1[%517, %c5_294] : memref<8x8xi32, #tpu.memory_space<smem>>
    %c0_i32_295 = arith.constant 0 : i32
    %519 = arith.maxsi %518, %c0_i32_295 : i32
    %c15_i32_296 = arith.constant 15 : i32
    %520 = arith.minsi %519, %c15_i32_296 : i32
    %521 = arith.index_cast %520 : i32 to index
    %c0_297 = arith.constant 0 : index
    %522 = vector.load %arg2[%521, %c0_297] : memref<16x128xf32, #tpu.memory_space<vmem>>, vector<1x128xf32>
    %523 = arith.addf %495, %522 : vector<1x128xf32>
    %524 = arith.index_cast %477 : i32 to index
    %c6_298 = arith.constant 6 : index
    %525 = memref.load %arg1[%524, %c6_298] : memref<8x8xi32, #tpu.memory_space<smem>>
    %c0_i32_299 = arith.constant 0 : i32
    %526 = arith.maxsi %525, %c0_i32_299 : i32
    %c15_i32_300 = arith.constant 15 : i32
    %527 = arith.minsi %526, %c15_i32_300 : i32
    %528 = arith.index_cast %527 : i32 to index
    %c0_301 = arith.constant 0 : index
    %529 = vector.load %arg2[%528, %c0_301] : memref<16x128xf32, #tpu.memory_space<vmem>>, vector<1x128xf32>
    %530 = arith.addf %502, %529 : vector<1x128xf32>
    %531 = arith.index_cast %477 : i32 to index
    %c7_302 = arith.constant 7 : index
    %532 = memref.load %arg1[%531, %c7_302] : memref<8x8xi32, #tpu.memory_space<smem>>
    %c0_i32_303 = arith.constant 0 : i32
    %533 = arith.maxsi %532, %c0_i32_303 : i32
    %c15_i32_304 = arith.constant 15 : i32
    %534 = arith.minsi %533, %c15_i32_304 : i32
    %535 = arith.index_cast %534 : i32 to index
    %c0_305 = arith.constant 0 : index
    %536 = vector.load %arg2[%535, %c0_305] : memref<16x128xf32, #tpu.memory_space<vmem>>, vector<1x128xf32>
    %537 = arith.addf %509, %536 : vector<1x128xf32>
    %538 = arith.addf %516, %523 : vector<1x128xf32>
    %539 = arith.addf %530, %537 : vector<1x128xf32>
    %540 = arith.addf %538, %539 : vector<1x128xf32>
    %cst_306 = arith.constant 1.250000e-01 : f32
    %541 = vector.broadcast %cst_306 : f32 to vector<1x128xf32>
    %542 = arith.mulf %540, %541 : vector<1x128xf32>
    %c7_307 = arith.constant 7 : index
    %c0_308 = arith.constant 0 : index
    %543 = vector.load %arg6[%c7_307, %c0_308] : memref<8x128xf32, #tpu.memory_space<vmem>>, vector<1x128xf32>
    tpu.vector_store %arg6[%c7_307, %c0_308], %542 {strides = array<i32>} : memref<8x128xf32, #tpu.memory_space<vmem>>, vector<1x128xf32>,
    %c0_309 = arith.constant 0 : index
    %c0_310 = arith.constant 0 : index
    %544 = vector.load %arg6[%c0_309, %c0_310] : memref<8x128xf32, #tpu.memory_space<vmem>>, vector<8x128xf32>
    %545 = math.tanh %544 : vector<8x128xf32>
    %c0_311 = arith.constant 0 : index
    %c0_312 = arith.constant 0 : index
    %546 = vector.load %arg3[%c0_311, %c0_312] : memref<128x128xf32, #tpu.memory_space<vmem>>, vector<128x128xf32>
    %cst_313 = arith.constant dense<0.000000e+00> : vector<8x128xf32>
    %547 = tpu.matmul %545, %546, %cst_313 {dimension_numbers = #tpu.dot_dimension_numbers<[1], [0], [0], [1], [0, 0, 1, 1], [], []>} : vector<8x128xf32>, vector<128x128xf32>, vector<8x128xf32> -> vector<8x128xf32>
    %c0_314 = arith.constant 0 : index
    %c0_315 = arith.constant 0 : index
    %548 = vector.load %arg4[%c0_314, %c0_315] : memref<1x128xf32, #tpu.memory_space<vmem>>, vector<1x128xf32>
    %549 = vector.broadcast %548 : vector<1x128xf32> to vector<8x128xf32>
    %550 = arith.addf %547, %549 : vector<8x128xf32>
    %c0_316 = arith.constant 0 : index
    %c0_317 = arith.constant 0 : index
    %551 = vector.load %arg5[%c0_316, %c0_317] : memref<8x128xf32, #tpu.memory_space<vmem>>, vector<8x128xf32>
    tpu.vector_store %arg5[%c0_316, %c0_317], %550 {strides = array<i32>} : memref<8x128xf32, #tpu.memory_space<vmem>>, vector<8x128xf32>,
    return
  }
  func.func @transform_0(%arg0: i32, %arg1: memref<8x8xi32, #tpu.memory_space<smem>>) -> (i32, i32) {
    %c0_i32 = arith.constant 0 : i32
    %c0_i32_0 = arith.constant 0 : i32
    %c0_i32_1 = arith.constant 0 : i32
    return %c0_i32, %c0_i32_0 : i32, i32
  }
  func.func @transform_1(%arg0: i32, %arg1: memref<8x8xi32, #tpu.memory_space<smem>>) -> (i32, i32) {
    %c0_i32 = arith.constant 0 : i32
    %c0_i32_0 = arith.constant 0 : i32
    %c0_i32_1 = arith.constant 0 : i32
    return %c0_i32, %c0_i32_0 : i32, i32
  }
  func.func @transform_2(%arg0: i32, %arg1: memref<8x8xi32, #tpu.memory_space<smem>>) -> (i32, i32) {
    %c0_i32 = arith.constant 0 : i32
    %c0_i32_0 = arith.constant 0 : i32
    %c0_i32_1 = arith.constant 0 : i32
    return %c0_i32, %c0_i32_0 : i32, i32
  }
  func.func @transform_3(%arg0: i32, %arg1: memref<8x8xi32, #tpu.memory_space<smem>>) -> (i32, i32) {
    %c0_i32 = arith.constant 0 : i32
    %c0_i32_0 = arith.constant 0 : i32
    return %arg0, %c0_i32 : i32, i32
  }
}

</mosaic_0001>

<llo_original>
// kernel: tpu_custom_call.1
$region0: #{tpu_custom_call.1}
  #allocation0 [shape = 'u32[]', space=smem, size = 0x4, offset = 0x4, fixed_abs, tag = 'smem constant byte address 0x4 - core index']
  #allocation1 [shape = 'u32[144,128]{1,0:T(1,128)}', space=vmem, size = 0x12000, scoped, tag = 'internal scratch']
  #allocation2 [shape = 'f32[8,128]{1,0:T(8,128)}', space=vmem, size = 0x1000, scoped, tag = 'scratch operand']
  #allocation3 [shape = 's32[1]{0}', space=sflag, size = 0x4, scoped, tag = 'scoped memory for tpu_custom_call.1']
  #allocation4 [shape = 'u8[4096]{0}', space=smem, size = 0x1000, scoped, tag = 'prefetched SMEM operand 0']
  %s0 = inlined_call_operand.hbm [shape: s32[8,8], index: 0, kind: input, shape index: {}]
  %s1 = inlined_call_operand.hbm [shape: f32[16,128], index: 1, kind: input, shape index: {}]
  %s2 = inlined_call_operand.hbm [shape: f32[128,128], index: 2, kind: input, shape index: {}]
  %s3 = inlined_call_operand.vmem [shape: f32[1,128], index: 3, kind: input, shape index: {}]
  %s4 = inlined_call_operand.hbm [shape: f32[8,128], index: 4, kind: output, shape index: {}]
  %s5 = sld [smem:[#allocation0]]
  $region30: #{tpu_custom_call.1} parent=0
    _
  %s7 = ssub.s32 1, %s5
  %s8 = scalar_select 0, %s7, %s5
  %10 = dma.hbm_to_smem %s0, 128, [#allocation4], [#allocation3]
  %11 = dma.done [#allocation3], 128
  %12 = sfence
  $region1: #{tpu_custom_call.1} parent=0
    #allocation5 [shape = 'u8[8192]{0}', space=vmem, size = 0x2000, scoped, tag = 'input window, operand 1, single buffered']
    #allocation6 [shape = 's32[1]{0}', space=sflag, size = 0x4, scoped, tag = 'scoped memory for tpu_custom_call.1']
    #allocation7 [shape = 's32[1]{0}', space=sflag, size = 0x4, scoped, tag = 'scoped memory for tpu_custom_call.1']
    #allocation8 [shape = 'u8[65536]{0}', space=vmem, size = 0x10000, scoped, tag = 'input window, operand 2, single buffered']
    #allocation9 [shape = 's32[1]{0}', space=sflag, size = 0x4, scoped, tag = 'scoped memory for tpu_custom_call.1']
    #allocation10 [shape = 'u8[4096]{0}', space=vmem, size = 0x1000, scoped, tag = 'output window, operand 0, single buffered']
    %13 = vsyncpa [#allocation6], 0
    %14 = vsyncpa [#allocation9], 0
    %15 = vsyncpa [#allocation7], 0
    // Predicated region
    $region2: #{tpu_custom_call.1} parent=1 // pred_check
      _
    $region3: #{tpu_custom_call.1} parent=1 // pred_check_branch
      %17 = sbr.rel (0) target = $region5
    $region4: #{tpu_custom_call.1} parent=1 // pred_region
      %s19 = ssub.s32 256, 256
      %20 = vsyncadd [#allocation6], %s19
      %s21 = sshll.u32 [#allocation5], 4
      %s22 = int_to_ptr.vmem [resolvable:$true] %s21
      %27 = dma.hbm_to_vmem [thread:$0]  %s1, 256, %s22, [#allocation6], 128, 128, 8
    $region5: #{tpu_custom_call.1} parent=1 // pred_fallthru
      _
    // Predicated region
    $region6: #{tpu_custom_call.1} parent=1 // pred_check
      _
    $region7: #{tpu_custom_call.1} parent=1 // pred_check_branch
      %29 = sbr.rel (0) target = $region9
    $region8: #{tpu_custom_call.1} parent=1 // pred_region
      %s31 = ssub.s32 2048, 2048
      %32 = vsyncadd [#allocation9], %s31
      %s33 = sshll.u32 [#allocation8], 4
      %s34 = int_to_ptr.vmem [resolvable:$true] %s33
      %39 = dma.hbm_to_vmem [thread:$0]  %s2, 2048, %s34, [#allocation9], 128, 128, 8
    $region9: #{tpu_custom_call.1} parent=1 // pred_fallthru
      _
    // Predicated region
    $region10: #{tpu_custom_call.1} parent=1 // pred_check
      _
    $region11: #{tpu_custom_call.1} parent=1 // pred_check_branch
      %41 = sbr.rel (0) target = $region13
    $region12: #{tpu_custom_call.1} parent=1 // pred_region
      _
    $region13: #{tpu_custom_call.1} parent=1 // pred_fallthru
      _
    // Predicated region
    $region14: #{tpu_custom_call.1} parent=1 // pred_check
      _
    $region15: #{tpu_custom_call.1} parent=1 // pred_check_branch
      %43 = sbr.rel (0) target = $region17
    $region16: #{tpu_custom_call.1} parent=1 // pred_region
      %44 = dma.done [#allocation6], 256
    $region17: #{tpu_custom_call.1} parent=1 // pred_fallthru
      _
    // Predicated region
    $region18: #{tpu_custom_call.1} parent=1 // pred_check
      _
    $region19: #{tpu_custom_call.1} parent=1 // pred_check_branch
      %46 = sbr.rel (0) target = $region21
    $region20: #{tpu_custom_call.1} parent=1 // pred_region
      %47 = dma.done [#allocation9], 2048
    $region21: #{tpu_custom_call.1} parent=1 // pred_fallthru
      _
    %s48 = smul.u32 0, 8
    %s49 = smul.u32 %s48, 128
    %s50 = sld [smem:[#allocation4 + %s49]]
    %p51 = scmp.gt.s32.totalorder %s50, 0
    %s52 = scalar_select %p51, %s50, 0
    %p53 = scmp.lt.s32.totalorder %s52, 15
    %s54 = scalar_select %p53, %s52, 15
    %s55 = scalar_lea.vmem [#allocation5], %s54
    %v56 = vld [vmem:[%s55] sm:$0x1]
    %v57 = vadd.f32 %v56, 0.0
    %s58 = sadd.s32 %s49, 1
    %s59 = sld [smem:[#allocation4 + %s58]]
    %p60 = scmp.gt.s32.totalorder %s59, 0
    %s61 = scalar_select %p60, %s59, 0
    %p62 = scmp.lt.s32.totalorder %s61, 15
    %s63 = scalar_select %p62, %s61, 15
    %s64 = scalar_lea.vmem [#allocation5], %s63
    %v65 = vld [vmem:[%s64] sm:$0x1]
    %v66 = vadd.f32 %v65, 0.0
    %s67 = sadd.s32 %s49, 2
    %s68 = sld [smem:[#allocation4 + %s67]]
    %p69 = scmp.gt.s32.totalorder %s68, 0
    %s70 = scalar_select %p69, %s68, 0
    %p71 = scmp.lt.s32.totalorder %s70, 15
    %s72 = scalar_select %p71, %s70, 15
    %s73 = scalar_lea.vmem [#allocation5], %s72
    %v74 = vld [vmem:[%s73] sm:$0x1]
    %v75 = vadd.f32 %v74, 0.0
    %s76 = sadd.s32 %s49, 3
    %s77 = sld [smem:[#allocation4 + %s76]]
    %p78 = scmp.gt.s32.totalorder %s77, 0
    %s79 = scalar_select %p78, %s77, 0
    %p80 = scmp.lt.s32.totalorder %s79, 15
    %s81 = scalar_select %p80, %s79, 15
    %s82 = scalar_lea.vmem [#allocation5], %s81
    %v83 = vld [vmem:[%s82] sm:$0x1]
    %v84 = vadd.f32 %v83, 0.0
    %s85 = sadd.s32 %s49, 4
    %s86 = sld [smem:[#allocation4 + %s85]]
    %p87 = scmp.gt.s32.totalorder %s86, 0
    %s88 = scalar_select %p87, %s86, 0
    %p89 = scmp.lt.s32.totalorder %s88, 15
    %s90 = scalar_select %p89, %s88, 15
    %s91 = scalar_lea.vmem [#allocation5], %s90
    %v92 = vld [vmem:[%s91] sm:$0x1]
    %v93 = vadd.f32 %v57, %v92
    %s94 = sadd.s32 %s49, 5
    %s95 = sld [smem:[#allocation4 + %s94]]
    %p96 = scmp.gt.s32.totalorder %s95, 0
    %s97 = scalar_select %p96, %s95, 0
    %p98 = scmp.lt.s32.totalorder %s97, 15
    %s99 = scalar_select %p98, %s97, 15
    %s100 = scalar_lea.vmem [#allocation5], %s99
    %v101 = vld [vmem:[%s100] sm:$0x1]
    %v102 = vadd.f32 %v66, %v101
    %s103 = sadd.s32 %s49, 6
    %s104 = sld [smem:[#allocation4 + %s103]]
    %p105 = scmp.gt.s32.totalorder %s104, 0
    %s106 = scalar_select %p105, %s104, 0
    %p107 = scmp.lt.s32.totalorder %s106, 15
    %s108 = scalar_select %p107, %s106, 15
    %s109 = scalar_lea.vmem [#allocation5], %s108
    %v110 = vld [vmem:[%s109] sm:$0x1]
    %v111 = vadd.f32 %v75, %v110
    %s112 = sadd.s32 %s49, 7
    %s113 = sld [smem:[#allocation4 + %s112]]
    %p114 = scmp.gt.s32.totalorder %s113, 0
    %s115 = scalar_select %p114, %s113, 0
    %p116 = scmp.lt.s32.totalorder %s115, 15
    %s117 = scalar_select %p116, %s115, 15
    %s118 = scalar_lea.vmem [#allocation5], %s117
    %v119 = vld [vmem:[%s118] sm:$0x1]
    %v120 = vadd.f32 %v84, %v119
    %v121 = vadd.f32 %v93, %v102
    %v122 = vadd.f32 %v111, %v120
    %v123 = vadd.f32 %v121, %v122
    %v124 = vmul.f32 %v123, 0.125
    %125 = vst [vmem:[#allocation2] sm:$0x1] %v124
    %s126 = sadd.s32 %s48, 1
    %s127 = smul.u32 %s126, 128
    %s128 = sld [smem:[#allocation4 + %s127]]
    %p129 = scmp.gt.s32.totalorder %s128, 0
    %s130 = scalar_select %p129, %s128, 0
    %p131 = scmp.lt.s32.totalorder %s130, 15
    %s132 = scalar_select %p131, %s130, 15
    %s133 = scalar_lea.vmem [#allocation5], %s132
    %v134 = vld [vmem:[%s133] sm:$0x1]
    %v135 = vadd.f32 %v134, 0.0
    %s136 = sadd.s32 %s127, 1
    %s137 = sld [smem:[#allocation4 + %s136]]
    %p138 = scmp.gt.s32.totalorder %s137, 0
    %s139 = scalar_select %p138, %s137, 0
    %p140 = scmp.lt.s32.totalorder %s139, 15
    %s141 = scalar_select %p140, %s139, 15
    %s142 = scalar_lea.vmem [#allocation5], %s141
    %v143 = vld [vmem:[%s142] sm:$0x1]
    %v144 = vadd.f32 %v143, 0.0
    %s145 = sadd.s32 %s127, 2
    %s146 = sld [smem:[#allocation4 + %s145]]
    %p147 = scmp.gt.s32.totalorder %s146, 0
    %s148 = scalar_select %p147, %s146, 0
    %p149 = scmp.lt.s32.totalorder %s148, 15
    %s150 = scalar_select %p149, %s148, 15
    %s151 = scalar_lea.vmem [#allocation5], %s150
    %v152 = vld [vmem:[%s151] sm:$0x1]
    %v153 = vadd.f32 %v152, 0.0
    %s154 = sadd.s32 %s127, 3
    %s155 = sld [smem:[#allocation4 + %s154]]
    %p156 = scmp.gt.s32.totalorder %s155, 0
    %s157 = scalar_select %p156, %s155, 0
    %p158 = scmp.lt.s32.totalorder %s157, 15
    %s159 = scalar_select %p158, %s157, 15
    %s160 = scalar_lea.vmem [#allocation5], %s159
    %v161 = vld [vmem:[%s160] sm:$0x1]
    %v162 = vadd.f32 %v161, 0.0
    %s163 = sadd.s32 %s127, 4
    %s164 = sld [smem:[#allocation4 + %s163]]
    %p165 = scmp.gt.s32.totalorder %s164, 0
    %s166 = scalar_select %p165, %s164, 0
    %p167 = scmp.lt.s32.totalorder %s166, 15
    %s168 = scalar_select %p167, %s166, 15
    %s169 = scalar_lea.vmem [#allocation5], %s168
    %v170 = vld [vmem:[%s169] sm:$0x1]
    %v171 = vadd.f32 %v135, %v170
    %s172 = sadd.s32 %s127, 5
    %s173 = sld [smem:[#allocation4 + %s172]]
    %p174 = scmp.gt.s32.totalorder %s173, 0
    %s175 = scalar_select %p174, %s173, 0
    %p176 = scmp.lt.s32.totalorder %s175, 15
    %s177 = scalar_select %p176, %s175, 15
    %s178 = scalar_lea.vmem [#allocation5], %s177
    %v179 = vld [vmem:[%s178] sm:$0x1]
    %v180 = vadd.f32 %v144, %v179
    %s181 = sadd.s32 %s127, 6
    %s182 = sld [smem:[#allocation4 + %s181]]
    %p183 = scmp.gt.s32.totalorder %s182, 0
    %s184 = scalar_select %p183, %s182, 0
    %p185 = scmp.lt.s32.totalorder %s184, 15
    %s186 = scalar_select %p185, %s184, 15
    %s187 = scalar_lea.vmem [#allocation5], %s186
    %v188 = vld [vmem:[%s187] sm:$0x1]
    %v189 = vadd.f32 %v153, %v188
    %s190 = sadd.s32 %s127, 7
    %s191 = sld [smem:[#allocation4 + %s190]]
    %p192 = scmp.gt.s32.totalorder %s191, 0
    %s193 = scalar_select %p192, %s191, 0
    %p194 = scmp.lt.s32.totalorder %s193, 15
    %s195 = scalar_select %p194, %s193, 15
    %s196 = scalar_lea.vmem [#allocation5], %s195
    %v197 = vld [vmem:[%s196] sm:$0x1]
    %v198 = vadd.f32 %v162, %v197
    %v199 = vadd.f32 %v171, %v180
    %v200 = vadd.f32 %v189, %v198
    %v201 = vadd.f32 %v199, %v200
    %v202 = vmul.f32 %v201, 0.125
    %203 = vst [vmem:[#allocation2 + $0x1] sm:$0x1] %v202
    %s204 = sadd.s32 %s48, 2
    %s205 = smul.u32 %s204, 128
    %s206 = sld [smem:[#allocation4 + %s205]]
    %p207 = scmp.gt.s32.totalorder %s206, 0
    %s208 = scalar_select %p207, %s206, 0
    %p209 = scmp.lt.s32.totalorder %s208, 15
    %s210 = scalar_select %p209, %s208, 15
    %s211 = scalar_lea.vmem [#allocation5], %s210
    %v212 = vld [vmem:[%s211] sm:$0x1]
    %v213 = vadd.f32 %v212, 0.0
    %s214 = sadd.s32 %s205, 1
    %s215 = sld [smem:[#allocation4 + %s214]]
    %p216 = scmp.gt.s32.totalorder %s215, 0
    %s217 = scalar_select %p216, %s215, 0
    %p218 = scmp.lt.s32.totalorder %s217, 15
    %s219 = scalar_select %p218, %s217, 15
    %s220 = scalar_lea.vmem [#allocation5], %s219
    %v221 = vld [vmem:[%s220] sm:$0x1]
    %v222 = vadd.f32 %v221, 0.0
    %s223 = sadd.s32 %s205, 2
    %s224 = sld [smem:[#allocation4 + %s223]]
    %p225 = scmp.gt.s32.totalorder %s224, 0
    %s226 = scalar_select %p225, %s224, 0
    %p227 = scmp.lt.s32.totalorder %s226, 15
    %s228 = scalar_select %p227, %s226, 15
    %s229 = scalar_lea.vmem [#allocation5], %s228
    %v230 = vld [vmem:[%s229] sm:$0x1]
    %v231 = vadd.f32 %v230, 0.0
    %s232 = sadd.s32 %s205, 3
    %s233 = sld [smem:[#allocation4 + %s232]]
    %p234 = scmp.gt.s32.totalorder %s233, 0
    %s235 = scalar_select %p234, %s233, 0
    %p236 = scmp.lt.s32.totalorder %s235, 15
    %s237 = scalar_select %p236, %s235, 15
    %s238 = scalar_lea.vmem [#allocation5], %s237
    %v239 = vld [vmem:[%s238] sm:$0x1]
    %v240 = vadd.f32 %v239, 0.0
    %s241 = sadd.s32 %s205, 4
    %s242 = sld [smem:[#allocation4 + %s241]]
    %p243 = scmp.gt.s32.totalorder %s242, 0
    %s244 = scalar_select %p243, %s242, 0
    %p245 = scmp.lt.s32.totalorder %s244, 15
    %s246 = scalar_select %p245, %s244, 15
    %s247 = scalar_lea.vmem [#allocation5], %s246
    %v248 = vld [vmem:[%s247] sm:$0x1]
    %v249 = vadd.f32 %v213, %v248
    %s250 = sadd.s32 %s205, 5
    %s251 = sld [smem:[#allocation4 + %s250]]
    %p252 = scmp.gt.s32.totalorder %s251, 0
    %s253 = scalar_select %p252, %s251, 0
    %p254 = scmp.lt.s32.totalorder %s253, 15
    %s255 = scalar_select %p254, %s253, 15
    %s256 = scalar_lea.vmem [#allocation5], %s255
    %v257 = vld [vmem:[%s256] sm:$0x1]
    %v258 = vadd.f32 %v222, %v257
    %s259 = sadd.s32 %s205, 6
    %s260 = sld [smem:[#allocation4 + %s259]]
    %p261 = scmp.gt.s32.totalorder %s260, 0
    %s262 = scalar_select %p261, %s260, 0
    %p263 = scmp.lt.s32.totalorder %s262, 15
    %s264 = scalar_select %p263, %s262, 15
    %s265 = scalar_lea.vmem [#allocation5], %s264
    %v266 = vld [vmem:[%s265] sm:$0x1]
    %v267 = vadd.f32 %v231, %v266
    %s268 = sadd.s32 %s205, 7
    %s269 = sld [smem:[#allocation4 + %s268]]
    %p270 = scmp.gt.s32.totalorder %s269, 0
    %s271 = scalar_select %p270, %s269, 0
    %p272 = scmp.lt.s32.totalorder %s271, 15
    %s273 = scalar_select %p272, %s271, 15
    %s274 = scalar_lea.vmem [#allocation5], %s273
    %v275 = vld [vmem:[%s274] sm:$0x1]
    %v276 = vadd.f32 %v240, %v275
    %v277 = vadd.f32 %v249, %v258
    %v278 = vadd.f32 %v267, %v276
    %v279 = vadd.f32 %v277, %v278
    %v280 = vmul.f32 %v279, 0.125
    %281 = vst [vmem:[#allocation2 + $0x2] sm:$0x1] %v280
    %s282 = sadd.s32 %s48, 3
    %s283 = smul.u32 %s282, 128
    %s284 = sld [smem:[#allocation4 + %s283]]
    %p285 = scmp.gt.s32.totalorder %s284, 0
    %s286 = scalar_select %p285, %s284, 0
    %p287 = scmp.lt.s32.totalorder %s286, 15
    %s288 = scalar_select %p287, %s286, 15
    %s289 = scalar_lea.vmem [#allocation5], %s288
    %v290 = vld [vmem:[%s289] sm:$0x1]
    %v291 = vadd.f32 %v290, 0.0
    %s292 = sadd.s32 %s283, 1
    %s293 = sld [smem:[#allocation4 + %s292]]
    %p294 = scmp.gt.s32.totalorder %s293, 0
    %s295 = scalar_select %p294, %s293, 0
    %p296 = scmp.lt.s32.totalorder %s295, 15
    %s297 = scalar_select %p296, %s295, 15
    %s298 = scalar_lea.vmem [#allocation5], %s297
    %v299 = vld [vmem:[%s298] sm:$0x1]
    %v300 = vadd.f32 %v299, 0.0
    %s301 = sadd.s32 %s283, 2
    %s302 = sld [smem:[#allocation4 + %s301]]
    %p303 = scmp.gt.s32.totalorder %s302, 0
    %s304 = scalar_select %p303, %s302, 0
    %p305 = scmp.lt.s32.totalorder %s304, 15
    %s306 = scalar_select %p305, %s304, 15
    %s307 = scalar_lea.vmem [#allocation5], %s306
    %v308 = vld [vmem:[%s307] sm:$0x1]
    %v309 = vadd.f32 %v308, 0.0
    %s310 = sadd.s32 %s283, 3
    %s311 = sld [smem:[#allocation4 + %s310]]
    %p312 = scmp.gt.s32.totalorder %s311, 0
    %s313 = scalar_select %p312, %s311, 0
    %p314 = scmp.lt.s32.totalorder %s313, 15
    %s315 = scalar_select %p314, %s313, 15
    %s316 = scalar_lea.vmem [#allocation5], %s315
    %v317 = vld [vmem:[%s316] sm:$0x1]
    %v318 = vadd.f32 %v317, 0.0
    %s319 = sadd.s32 %s283, 4
    %s320 = sld [smem:[#allocation4 + %s319]]
    %p321 = scmp.gt.s32.totalorder %s320, 0
    %s322 = scalar_select %p321, %s320, 0
    %p323 = scmp.lt.s32.totalorder %s322, 15
    %s324 = scalar_select %p323, %s322, 15
    %s325 = scalar_lea.vmem [#allocation5], %s324
    %v326 = vld [vmem:[%s325] sm:$0x1]
    %v327 = vadd.f32 %v291, %v326
    %s328 = sadd.s32 %s283, 5
    %s329 = sld [smem:[#allocation4 + %s328]]
    %p330 = scmp.gt.s32.totalorder %s329, 0
    %s331 = scalar_select %p330, %s329, 0
    %p332 = scmp.lt.s32.totalorder %s331, 15
    %s333 = scalar_select %p332, %s331, 15
    %s334 = scalar_lea.vmem [#allocation5], %s333
    %v335 = vld [vmem:[%s334] sm:$0x1]
    %v336 = vadd.f32 %v300, %v335
    %s337 = sadd.s32 %s283, 6
    %s338 = sld [smem:[#allocation4 + %s337]]
    %p339 = scmp.gt.s32.totalorder %s338, 0
    %s340 = scalar_select %p339, %s338, 0
    %p341 = scmp.lt.s32.totalorder %s340, 15
    %s342 = scalar_select %p341, %s340, 15
    %s343 = scalar_lea.vmem [#allocation5], %s342
    %v344 = vld [vmem:[%s343] sm:$0x1]
    %v345 = vadd.f32 %v309, %v344
    %s346 = sadd.s32 %s283, 7
    %s347 = sld [smem:[#allocation4 + %s346]]
    %p348 = scmp.gt.s32.totalorder %s347, 0
    %s349 = scalar_select %p348, %s347, 0
    %p350 = scmp.lt.s32.totalorder %s349, 15
    %s351 = scalar_select %p350, %s349, 15
    %s352 = scalar_lea.vmem [#allocation5], %s351
    %v353 = vld [vmem:[%s352] sm:$0x1]
    %v354 = vadd.f32 %v318, %v353
    %v355 = vadd.f32 %v327, %v336
    %v356 = vadd.f32 %v345, %v354
    %v357 = vadd.f32 %v355, %v356
    %v358 = vmul.f32 %v357, 0.125
    %359 = vst [vmem:[#allocation2 + $0x3] sm:$0x1] %v358
    %s360 = sadd.s32 %s48, 4
    %s361 = smul.u32 %s360, 128
    %s362 = sld [smem:[#allocation4 + %s361]]
    %p363 = scmp.gt.s32.totalorder %s362, 0
    %s364 = scalar_select %p363, %s362, 0
    %p365 = scmp.lt.s32.totalorder %s364, 15
    %s366 = scalar_select %p365, %s364, 15
    %s367 = scalar_lea.vmem [#allocation5], %s366
    %v368 = vld [vmem:[%s367] sm:$0x1]
    %v369 = vadd.f32 %v368, 0.0
    %s370 = sadd.s32 %s361, 1
    %s371 = sld [smem:[#allocation4 + %s370]]
    %p372 = scmp.gt.s32.totalorder %s371, 0
    %s373 = scalar_select %p372, %s371, 0
    %p374 = scmp.lt.s32.totalorder %s373, 15
    %s375 = scalar_select %p374, %s373, 15
    %s376 = scalar_lea.vmem [#allocation5], %s375
    %v377 = vld [vmem:[%s376] sm:$0x1]
    %v378 = vadd.f32 %v377, 0.0
    %s379 = sadd.s32 %s361, 2
    %s380 = sld [smem:[#allocation4 + %s379]]
    %p381 = scmp.gt.s32.totalorder %s380, 0
    %s382 = scalar_select %p381, %s380, 0
    %p383 = scmp.lt.s32.totalorder %s382, 15
    %s384 = scalar_select %p383, %s382, 15
    %s385 = scalar_lea.vmem [#allocation5], %s384
    %v386 = vld [vmem:[%s385] sm:$0x1]
    %v387 = vadd.f32 %v386, 0.0
    %s388 = sadd.s32 %s361, 3
    %s389 = sld [smem:[#allocation4 + %s388]]
    %p390 = scmp.gt.s32.totalorder %s389, 0
    %s391 = scalar_select %p390, %s389, 0
    %p392 = scmp.lt.s32.totalorder %s391, 15
    %s393 = scalar_select %p392, %s391, 15
    %s394 = scalar_lea.vmem [#allocation5], %s393
    %v395 = vld [vmem:[%s394] sm:$0x1]
    %v396 = vadd.f32 %v395, 0.0
    %s397 = sadd.s32 %s361, 4
    %s398 = sld [smem:[#allocation4 + %s397]]
    %p399 = scmp.gt.s32.totalorder %s398, 0
    %s400 = scalar_select %p399, %s398, 0
    %p401 = scmp.lt.s32.totalorder %s400, 15
    %s402 = scalar_select %p401, %s400, 15
    %s403 = scalar_lea.vmem [#allocation5], %s402
    %v404 = vld [vmem:[%s403] sm:$0x1]
    %v405 = vadd.f32 %v369, %v404
    %s406 = sadd.s32 %s361, 5
    %s407 = sld [smem:[#allocation4 + %s406]]
    %p408 = scmp.gt.s32.totalorder %s407, 0
    %s409 = scalar_select %p408, %s407, 0
    %p410 = scmp.lt.s32.totalorder %s409, 15
    %s411 = scalar_select %p410, %s409, 15
    %s412 = scalar_lea.vmem [#allocation5], %s411
    %v413 = vld [vmem:[%s412] sm:$0x1]
    %v414 = vadd.f32 %v378, %v413
    %s415 = sadd.s32 %s361, 6
    %s416 = sld [smem:[#allocation4 + %s415]]
    %p417 = scmp.gt.s32.totalorder %s416, 0
    %s418 = scalar_select %p417, %s416, 0
    %p419 = scmp.lt.s32.totalorder %s418, 15
    %s420 = scalar_select %p419, %s418, 15
    %s421 = scalar_lea.vmem [#allocation5], %s420
    %v422 = vld [vmem:[%s421] sm:$0x1]
    %v423 = vadd.f32 %v387, %v422
    %s424 = sadd.s32 %s361, 7
    %s425 = sld [smem:[#allocation4 + %s424]]
    %p426 = scmp.gt.s32.totalorder %s425, 0
    %s427 = scalar_select %p426, %s425, 0
    %p428 = scmp.lt.s32.totalorder %s427, 15
    %s429 = scalar_select %p428, %s427, 15
    %s430 = scalar_lea.vmem [#allocation5], %s429
    %v431 = vld [vmem:[%s430] sm:$0x1]
    %v432 = vadd.f32 %v396, %v431
    %v433 = vadd.f32 %v405, %v414
    %v434 = vadd.f32 %v423, %v432
    %v435 = vadd.f32 %v433, %v434
    %v436 = vmul.f32 %v435, 0.125
    %437 = vst [vmem:[#allocation2 + $0x4] sm:$0x1] %v436
    %s438 = sadd.s32 %s48, 5
    %s439 = smul.u32 %s438, 128
    %s440 = sld [smem:[#allocation4 + %s439]]
    %p441 = scmp.gt.s32.totalorder %s440, 0
    %s442 = scalar_select %p441, %s440, 0
    %p443 = scmp.lt.s32.totalorder %s442, 15
    %s444 = scalar_select %p443, %s442, 15
    %s445 = scalar_lea.vmem [#allocation5], %s444
    %v446 = vld [vmem:[%s445] sm:$0x1]
    %v447 = vadd.f32 %v446, 0.0
    %s448 = sadd.s32 %s439, 1
    %s449 = sld [smem:[#allocation4 + %s448]]
    %p450 = scmp.gt.s32.totalorder %s449, 0
    %s451 = scalar_select %p450, %s449, 0
    %p452 = scmp.lt.s32.totalorder %s451, 15
    %s453 = scalar_select %p452, %s451, 15
    %s454 = scalar_lea.vmem [#allocation5], %s453
    %v455 = vld [vmem:[%s454] sm:$0x1]
    %v456 = vadd.f32 %v455, 0.0
    %s457 = sadd.s32 %s439, 2
    %s458 = sld [smem:[#allocation4 + %s457]]
    %p459 = scmp.gt.s32.totalorder %s458, 0
    %s460 = scalar_select %p459, %s458, 0
    %p461 = scmp.lt.s32.totalorder %s460, 15
    %s462 = scalar_select %p461, %s460, 15
    %s463 = scalar_lea.vmem [#allocation5], %s462
    %v464 = vld [vmem:[%s463] sm:$0x1]
    %v465 = vadd.f32 %v464, 0.0
    %s466 = sadd.s32 %s439, 3
    %s467 = sld [smem:[#allocation4 + %s466]]
    %p468 = scmp.gt.s32.totalorder %s467, 0
    %s469 = scalar_select %p468, %s467, 0
    %p470 = scmp.lt.s32.totalorder %s469, 15
    %s471 = scalar_select %p470, %s469, 15
    %s472 = scalar_lea.vmem [#allocation5], %s471
    %v473 = vld [vmem:[%s472] sm:$0x1]
    %v474 = vadd.f32 %v473, 0.0
    %s475 = sadd.s32 %s439, 4
    %s476 = sld [smem:[#allocation4 + %s475]]
    %p477 = scmp.gt.s32.totalorder %s476, 0
    %s478 = scalar_select %p477, %s476, 0
    %p479 = scmp.lt.s32.totalorder %s478, 15
    %s480 = scalar_select %p479, %s478, 15
    %s481 = scalar_lea.vmem [#allocation5], %s480
    %v482 = vld [vmem:[%s481] sm:$0x1]
    %v483 = vadd.f32 %v447, %v482
    %s484 = sadd.s32 %s439, 5
    %s485 = sld [smem:[#allocation4 + %s484]]
    %p486 = scmp.gt.s32.totalorder %s485, 0
    %s487 = scalar_select %p486, %s485, 0
    %p488 = scmp.lt.s32.totalorder %s487, 15
    %s489 = scalar_select %p488, %s487, 15
    %s490 = scalar_lea.vmem [#allocation5], %s489
    %v491 = vld [vmem:[%s490] sm:$0x1]
    %v492 = vadd.f32 %v456, %v491
    %s493 = sadd.s32 %s439, 6
    %s494 = sld [smem:[#allocation4 + %s493]]
    %p495 = scmp.gt.s32.totalorder %s494, 0
    %s496 = scalar_select %p495, %s494, 0
    %p497 = scmp.lt.s32.totalorder %s496, 15
    %s498 = scalar_select %p497, %s496, 15
    %s499 = scalar_lea.vmem [#allocation5], %s498
    %v500 = vld [vmem:[%s499] sm:$0x1]
    %v501 = vadd.f32 %v465, %v500
    %s502 = sadd.s32 %s439, 7
    %s503 = sld [smem:[#allocation4 + %s502]]
    %p504 = scmp.gt.s32.totalorder %s503, 0
    %s505 = scalar_select %p504, %s503, 0
    %p506 = scmp.lt.s32.totalorder %s505, 15
    %s507 = scalar_select %p506, %s505, 15
    %s508 = scalar_lea.vmem [#allocation5], %s507
    %v509 = vld [vmem:[%s508] sm:$0x1]
    %v510 = vadd.f32 %v474, %v509
    %v511 = vadd.f32 %v483, %v492
    %v512 = vadd.f32 %v501, %v510
    %v513 = vadd.f32 %v511, %v512
    %v514 = vmul.f32 %v513, 0.125
    %515 = vst [vmem:[#allocation2 + $0x5] sm:$0x1] %v514
    %s516 = sadd.s32 %s48, 6
    %s517 = smul.u32 %s516, 128
    %s518 = sld [smem:[#allocation4 + %s517]]
    %p519 = scmp.gt.s32.totalorder %s518, 0
    %s520 = scalar_select %p519, %s518, 0
    %p521 = scmp.lt.s32.totalorder %s520, 15
    %s522 = scalar_select %p521, %s520, 15
    %s523 = scalar_lea.vmem [#allocation5], %s522
    %v524 = vld [vmem:[%s523] sm:$0x1]
    %v525 = vadd.f32 %v524, 0.0
    %s526 = sadd.s32 %s517, 1
    %s527 = sld [smem:[#allocation4 + %s526]]
    %p528 = scmp.gt.s32.totalorder %s527, 0
    %s529 = scalar_select %p528, %s527, 0
    %p530 = scmp.lt.s32.totalorder %s529, 15
    %s531 = scalar_select %p530, %s529, 15
    %s532 = scalar_lea.vmem [#allocation5], %s531
    %v533 = vld [vmem:[%s532] sm:$0x1]
    %v534 = vadd.f32 %v533, 0.0
    %s535 = sadd.s32 %s517, 2
    %s536 = sld [smem:[#allocation4 + %s535]]
    %p537 = scmp.gt.s32.totalorder %s536, 0
    %s538 = scalar_select %p537, %s536, 0
    %p539 = scmp.lt.s32.totalorder %s538, 15
    %s540 = scalar_select %p539, %s538, 15
    %s541 = scalar_lea.vmem [#allocation5], %s540
    %v542 = vld [vmem:[%s541] sm:$0x1]
    %v543 = vadd.f32 %v542, 0.0
    %s544 = sadd.s32 %s517, 3
    %s545 = sld [smem:[#allocation4 + %s544]]
    %p546 = scmp.gt.s32.totalorder %s545, 0
    %s547 = scalar_select %p546, %s545, 0
    %p548 = scmp.lt.s32.totalorder %s547, 15
    %s549 = scalar_select %p548, %s547, 15
    %s550 = scalar_lea.vmem [#allocation5], %s549
    %v551 = vld [vmem:[%s550] sm:$0x1]
    %v552 = vadd.f32 %v551, 0.0
    %s553 = sadd.s32 %s517, 4
    %s554 = sld [smem:[#allocation4 + %s553]]
    %p555 = scmp.gt.s32.totalorder %s554, 0
    %s556 = scalar_select %p555, %s554, 0
    %p557 = scmp.lt.s32.totalorder %s556, 15
    %s558 = scalar_select %p557, %s556, 15
    %s559 = scalar_lea.vmem [#allocation5], %s558
    %v560 = vld [vmem:[%s559] sm:$0x1]
    %v561 = vadd.f32 %v525, %v560
    %s562 = sadd.s32 %s517, 5
    %s563 = sld [smem:[#allocation4 + %s562]]
    %p564 = scmp.gt.s32.totalorder %s563, 0
    %s565 = scalar_select %p564, %s563, 0
    %p566 = scmp.lt.s32.totalorder %s565, 15
    %s567 = scalar_select %p566, %s565, 15
    %s568 = scalar_lea.vmem [#allocation5], %s567
    %v569 = vld [vmem:[%s568] sm:$0x1]
    %v570 = vadd.f32 %v534, %v569
    %s571 = sadd.s32 %s517, 6
    %s572 = sld [smem:[#allocation4 + %s571]]
    %p573 = scmp.gt.s32.totalorder %s572, 0
    %s574 = scalar_select %p573, %s572, 0
    %p575 = scmp.lt.s32.totalorder %s574, 15
    %s576 = scalar_select %p575, %s574, 15
    %s577 = scalar_lea.vmem [#allocation5], %s576
    %v578 = vld [vmem:[%s577] sm:$0x1]
    %v579 = vadd.f32 %v543, %v578
    %s580 = sadd.s32 %s517, 7
    %s581 = sld [smem:[#allocation4 + %s580]]
    %p582 = scmp.gt.s32.totalorder %s581, 0
    %s583 = scalar_select %p582, %s581, 0
    %p584 = scmp.lt.s32.totalorder %s583, 15
    %s585 = scalar_select %p584, %s583, 15
    %s586 = scalar_lea.vmem [#allocation5], %s585
    %v587 = vld [vmem:[%s586] sm:$0x1]
    %v588 = vadd.f32 %v552, %v587
    %v589 = vadd.f32 %v561, %v570
    %v590 = vadd.f32 %v579, %v588
    %v591 = vadd.f32 %v589, %v590
    %v592 = vmul.f32 %v591, 0.125
    %593 = vst [vmem:[#allocation2 + $0x6] sm:$0x1] %v592
    %s594 = sadd.s32 %s48, 7
    %s595 = smul.u32 %s594, 128
    %s596 = sld [smem:[#allocation4 + %s595]]
    %p597 = scmp.gt.s32.totalorder %s596, 0
    %s598 = scalar_select %p597, %s596, 0
    %p599 = scmp.lt.s32.totalorder %s598, 15
    %s600 = scalar_select %p599, %s598, 15
    %s601 = scalar_lea.vmem [#allocation5], %s600
    %v602 = vld [vmem:[%s601] sm:$0x1]
    %v603 = vadd.f32 %v602, 0.0
    %s604 = sadd.s32 %s595, 1
    %s605 = sld [smem:[#allocation4 + %s604]]
    %p606 = scmp.gt.s32.totalorder %s605, 0
    %s607 = scalar_select %p606, %s605, 0
    %p608 = scmp.lt.s32.totalorder %s607, 15
    %s609 = scalar_select %p608, %s607, 15
    %s610 = scalar_lea.vmem [#allocation5], %s609
    %v611 = vld [vmem:[%s610] sm:$0x1]
    %v612 = vadd.f32 %v611, 0.0
    %s613 = sadd.s32 %s595, 2
    %s614 = sld [smem:[#allocation4 + %s613]]
    %p615 = scmp.gt.s32.totalorder %s614, 0
    %s616 = scalar_select %p615, %s614, 0
    %p617 = scmp.lt.s32.totalorder %s616, 15
    %s618 = scalar_select %p617, %s616, 15
    %s619 = scalar_lea.vmem [#allocation5], %s618
    %v620 = vld [vmem:[%s619] sm:$0x1]
    %v621 = vadd.f32 %v620, 0.0
    %s622 = sadd.s32 %s595, 3
    %s623 = sld [smem:[#allocation4 + %s622]]
    %p624 = scmp.gt.s32.totalorder %s623, 0
    %s625 = scalar_select %p624, %s623, 0
    %p626 = scmp.lt.s32.totalorder %s625, 15
    %s627 = scalar_select %p626, %s625, 15
    %s628 = scalar_lea.vmem [#allocation5], %s627
    %v629 = vld [vmem:[%s628] sm:$0x1]
    %v630 = vadd.f32 %v629, 0.0
    %s631 = sadd.s32 %s595, 4
    %s632 = sld [smem:[#allocation4 + %s631]]
    %p633 = scmp.gt.s32.totalorder %s632, 0
    %s634 = scalar_select %p633, %s632, 0
    %p635 = scmp.lt.s32.totalorder %s634, 15
    %s636 = scalar_select %p635, %s634, 15
    %s637 = scalar_lea.vmem [#allocation5], %s636
    %v638 = vld [vmem:[%s637] sm:$0x1]
    %v639 = vadd.f32 %v603, %v638
    %s640 = sadd.s32 %s595, 5
    %s641 = sld [smem:[#allocation4 + %s640]]
    %p642 = scmp.gt.s32.totalorder %s641, 0
    %s643 = scalar_select %p642, %s641, 0
    %p644 = scmp.lt.s32.totalorder %s643, 15
    %s645 = scalar_select %p644, %s643, 15
    %s646 = scalar_lea.vmem [#allocation5], %s645
    %v647 = vld [vmem:[%s646] sm:$0x1]
    %v648 = vadd.f32 %v612, %v647
    %s649 = sadd.s32 %s595, 6
    %s650 = sld [smem:[#allocation4 + %s649]]
    %p651 = scmp.gt.s32.totalorder %s650, 0
    %s652 = scalar_select %p651, %s650, 0
    %p653 = scmp.lt.s32.totalorder %s652, 15
    %s654 = scalar_select %p653, %s652, 15
    %s655 = scalar_lea.vmem [#allocation5], %s654
    %v656 = vld [vmem:[%s655] sm:$0x1]
    %v657 = vadd.f32 %v621, %v656
    %s658 = sadd.s32 %s595, 7
    %s659 = sld [smem:[#allocation4 + %s658]]
    %p660 = scmp.gt.s32.totalorder %s659, 0
    %s661 = scalar_select %p660, %s659, 0
    %p662 = scmp.lt.s32.totalorder %s661, 15
    %s663 = scalar_select %p662, %s661, 15
    %s664 = scalar_lea.vmem [#allocation5], %s663
    %v665 = vld [vmem:[%s664] sm:$0x1]
    %v666 = vadd.f32 %v630, %v665
    %v667 = vadd.f32 %v639, %v648
    %v668 = vadd.f32 %v657, %v666
    %v669 = vadd.f32 %v667, %v668
    %v670 = vmul.f32 %v669, 0.125
    %671 = vst [vmem:[#allocation2 + $0x7] sm:$0x1] %v670
    %v672 = vld [vmem:[#allocation2] sm:$0xff]
    %v673 = vtanh.pop %v672
    %v674 = vld [vmem:[#allocation8] sm:$0xff]
    %v675 = vld [vmem:[#allocation8 + $0x8] sm:$0xff]
    %v676 = vld [vmem:[#allocation8 + $0x10] sm:$0xff]
    %v677 = vld [vmem:[#allocation8 + $0x18] sm:$0xff]
    %v678 = vld [vmem:[#allocation8 + $0x20] sm:$0xff]
    %v679 = vld [vmem:[#allocation8 + $0x28] sm:$0xff]
    %v680 = vld [vmem:[#allocation8 + $0x30] sm:$0xff]
    %v681 = vld [vmem:[#allocation8 + $0x38] sm:$0xff]
    %v682 = vld [vmem:[#allocation8 + $0x40] sm:$0xff]
    %v683 = vld [vmem:[#allocation8 + $0x48] sm:$0xff]
    %v684 = vld [vmem:[#allocation8 + $0x50] sm:$0xff]
    %v685 = vld [vmem:[#allocation8 + $0x58] sm:$0xff]
    %v686 = vld [vmem:[#allocation8 + $0x60] sm:$0xff]
    %v687 = vld [vmem:[#allocation8 + $0x68] sm:$0xff]
    %v688 = vld [vmem:[#allocation8 + $0x70] sm:$0xff]
    %v689 = vld [vmem:[#allocation8 + $0x78] sm:$0xff]
    %v690 = vld [vmem:[%s3] sm:$0x1]
    %v692 = vlaneseq
    %v693 = vshrl.u32 %v692, 7
    %v694 = vsub.s32 0, %v693
    %v695 = vrot.slane %v690, %v694
    %697 = vmatprep.subr.mxu0 0.0
    %698 = vmatpush1.msra.mxu0 %v674
    %699 = vmatprep.subr.mxu0 0.0
    %700 = vmatpush1.msra.mxu0 %v675
    %701 = vmatprep.subr.mxu0 0.0
    %702 = vmatpush1.msra.mxu0 %v676
    %703 = vmatprep.subr.mxu0 0.0
    %704 = vmatpush1.msra.mxu0 %v677
    %705 = vmatprep.subr.mxu0 0.0
    %706 = vmatpush1.msra.mxu0 %v678
    %707 = vmatprep.subr.mxu0 0.0
    %708 = vmatpush1.msra.mxu0 %v679
    %709 = vmatprep.subr.mxu0 0.0
    %710 = vmatpush1.msra.mxu0 %v680
    %711 = vmatprep.subr.mxu0 0.0
    %712 = vmatpush1.msra.mxu0 %v681
    %713 = vmatprep.subr.mxu0 0.0
    %714 = vmatpush1.msra.mxu0 %v682
    %715 = vmatprep.subr.mxu0 0.0
    %716 = vmatpush1.msra.mxu0 %v683
    %717 = vmatprep.subr.mxu0 0.0
    %718 = vmatpush1.msra.mxu0 %v684
    %719 = vmatprep.subr.mxu0 0.0
    %720 = vmatpush1.msra.mxu0 %v685
    %721 = vmatprep.subr.mxu0 0.0
    %722 = vmatpush1.msra.mxu0 %v686
    %723 = vmatprep.subr.mxu0 0.0
    %724 = vmatpush1.msra.mxu0 %v687
    %725 = vmatprep.subr.mxu0 0.0
    %726 = vmatpush1.msra.mxu0 %v688
    %727 = vmatprep.subr.mxu0 0.0
    %728 = vmatpush1.msra.mxu0 %v689
    %729 = vmatprep.subr.mxu0 0.0
    %730 = vmatpush1.msra.mxu0 0.0
    %731 = vmatprep.subr.mxu0 0.0
    %732 = vmatpush1.msra.mxu0 0.0
    %733 = vmatprep.subr.mxu0 0.0
    %734 = vmatpush1.msra.mxu0 0.0
    %735 = vmatprep.subr.mxu0 0.0
    %736 = vmatpush1.msra.mxu0 0.0
    %737 = vmatprep.subr.mxu0 0.0
    %738 = vmatpush1.msra.mxu0 0.0
    %739 = vmatprep.subr.mxu0 0.0
    %740 = vmatpush1.msra.mxu0 0.0
    %741 = vmatprep.subr.mxu0 0.0
    %742 = vmatpush1.msra.mxu0 0.0
    %743 = vmatprep.subr.mxu0 0.0
    %744 = vmatpush1.msra.mxu0 0.0
    %745 = vmatprep.subr.mxu0 0.0
    %746 = vmatpush1.msra.mxu0 0.0
    %747 = vmatprep.subr.mxu0 0.0
    %748 = vmatpush1.msra.mxu0 0.0
    %749 = vmatprep.subr.mxu0 0.0
    %750 = vmatpush1.msra.mxu0 0.0
    %751 = vmatprep.subr.mxu0 0.0
    %752 = vmatpush1.msra.mxu0 0.0
    %753 = vmatprep.subr.mxu0 0.0
    %754 = vmatpush1.msra.mxu0 0.0
    %755 = vmatprep.subr.mxu0 0.0
    %756 = vmatpush1.msra.mxu0 0.0
    %757 = vmatprep.subr.mxu0 0.0
    %758 = vmatpush1.msra.mxu0 0.0
    %759 = vmatprep.subr.mxu0 0.0
    %760 = vmatpush1.msra.mxu0 0.0
    %761 = vmatprep.mubr.f32.mxu0 0.0
    %762 = vmatmul.mubr.f32.gmra.mrb[0].mxu0 %v673
    %v763 = vpop.f32.mrb[0].mxu0
    %v764 = vadd.f32 %v695, %v763
    %v765 = vpop.f32.mrb[0].mxu0
    %766 = vdwg.mxu0
    %767 = vst [vmem:[#allocation10] sm:$0xff] %v764
    // Predicated region
    $region22: #{tpu_custom_call.1} parent=1 // pred_check
      _
    $region23: #{tpu_custom_call.1} parent=1 // pred_check_branch
      %769 = sbr.rel (0) target = $region25
    $region24: #{tpu_custom_call.1} parent=1 // pred_region
      %s771 = ssub.s32 128, 128
      %772 = vsyncadd [#allocation7], %s771
      %s774 = sshll.u32 [#allocation10], 4
      %s775 = int_to_ptr.vmem [resolvable:$true] %s774
      %777 = dma.vmem_to_hbm [thread:$0]  %s775, 128, %s4, [#allocation7]
    $region25: #{tpu_custom_call.1} parent=1 // pred_fallthru
      _
    // Predicated region
    $region26: #{tpu_custom_call.1} parent=1 // pred_check
      _
    $region27: #{tpu_custom_call.1} parent=1 // pred_check_branch
      %779 = sbr.rel (0) target = $region29
    $region28: #{tpu_custom_call.1} parent=1 // pred_region
      %780 = dma.done [#allocation7], 128
    $region29: #{tpu_custom_call.1} parent=1 // pred_fallthru
      _
    %781 = vsyncpa [#allocation6], 1
    %782 = vsyncpa [#allocation9], 1
    %783 = vsyncpa [#allocation7], 1

</llo_original>
